<compile_context>
chip_gen: v5e
topology: v5e:2x2
jax: 0.10.0
libtpu: 0.0.40
codegen_flags: <defaults>
</compile_context>

<pallas_src>
import functools
import math

import jax
import jax.numpy as jnp
from jax.experimental import pallas as pl
from jax.experimental.pallas import tpu as pltpu

_LANE = 128
_OUT_PAD = _LANE  # final q column padded to a full lane width (unmasked stores)


def _round_up(x, m):
    return ((x + m - 1) // m) * m


def _cdiv(a, b):
    return -(-a // b)


def _device_kind():
    try:
        return jax.devices()[0].device_kind.lower()
    except Exception:
        return ""


def _tile_config(batch, device_kind):
    """Per-generation batch tile / VMEM limit.

    v7x: 64 MiB VMEM per TensorCore -> smaller cap, and grid >= 2 whenever the
    batch allows so both cores receive work under "parallel" semantics.
    v5e/v6e: 128 MiB VMEM -> large tiles amortize per-grid-step overhead.
    Balanced tiling bounds padding waste for ragged batch sizes."""
    is_v7 = "v7" in device_kind
    cap = 256 if is_v7 else 1024
    bp8 = _round_up(max(int(batch), 1), 8)
    n_tiles = max(1, _cdiv(bp8, cap))
    if is_v7 and bp8 >= 16:
        n_tiles = max(n_tiles, 2)          # keep both v7x TensorCores busy
    tile_b = _round_up(_cdiv(bp8, n_tiles), 8)
    vmem_limit = (48 << 20) if is_v7 else (96 << 20)
    return tile_b, vmem_limit, is_v7


def _critic_kernel(x_ref, a_ref,
                   w1x_ref, w1a_ref, b1_ref,
                   w2_ref, b2_ref,
                   w3_ref, b3_ref,
                   w5_ref, b5_ref,
                   w6_ref, b6_ref,
                   w4_ref, b4_ref,
                   out_ref):
    """Fused 6-layer critic MLP on one (TILE_B, feat) batch tile.

    Matmuls run in the weight dtype (f32 or bf16) with f32 accumulation; the
    bias add + ReLU stay in f32 and are followed by a single cast back to the
    compute dtype, so the wide (TILE_B, 1024) activation is held in bf16."""
    cdt = w2_ref.dtype

    def dense(h, w_ref, b_ref):
        z = jnp.dot(h, w_ref[...], preferred_element_type=jnp.float32)
        return z + b_ref[...]          # (1, out) f32 bias broadcasts over rows

    def relu_c(z):
        # ReLU in f32, then exactly one cast to the matmul dtype.
        return jnp.maximum(z, 0.0).astype(cdt)

    # fc1 split into x- and a- halves (no concatenated activation needed).
    z1 = (jnp.dot(x_ref[...].astype(cdt), w1x_ref[...],
                  preferred_element_type=jnp.float32)
          + jnp.dot(a_ref[...].astype(cdt), w1a_ref[...],
                    preferred_element_type=jnp.float32)
          + b1_ref[...])
    h = relu_c(z1)
    h = relu_c(dense(h, w2_ref, b2_ref))
    h = relu_c(dense(h, w3_ref, b3_ref))
    h = relu_c(dense(h, w5_ref, b5_ref))   # (TILE_B, 1024) kept in cdt (bf16)
    h = relu_c(dense(h, w6_ref, b6_ref))
    # fc4: weight padded to [hidden_p, 128] with the real column at index 0,
    # so the output store is a full 128-lane unmasked store.
    out_ref[...] = dense(h, w4_ref, b4_ref).astype(out_ref.dtype)


@functools.partial(
    jax.jit,
    static_argnames=("tile_b", "vmem_limit_bytes", "single_buffer_weights"))
def _critic_forward_impl(x, a, kparams, *, tile_b, vmem_limit_bytes,
                         single_buffer_weights):
    weights = tuple(kparams)
    (w1x, w1a, b1, w2, b2, w3, b3, w5, b5, w6, b6, w4, b4) = weights
    B, state_dim = x.shape
    action_dim = a.shape[1]

    grid_n = _cdiv(B, tile_b)
    bp = grid_n * tile_b
    if bp != B:
        x = jnp.pad(x, ((0, bp - B), (0, 0)))
        a = jnp.pad(a, ((0, bp - B), (0, 0)))

    # Output writeback dtype follows the weight dtype: bf16 halves the padded
    # (bp, 128) writeback bytes (the dominant HBM traffic at large batch);
    # f32 keeps the exact-test path bit-accurate.
    out_dtype = jnp.bfloat16 if w2.dtype == jnp.bfloat16 else jnp.float32

    # Weights/biases: full-array blocks, same block index every grid step ->
    # they remain VMEM-resident across the whole batch loop. On v7x the dead
    # second pipeline buffer is dropped (buys TILE_B headroom in 64 MiB VMEM).
    if single_buffer_weights:
        weight_specs = [
            pl.BlockSpec(w.shape, lambda i: (0, 0),
                         pipeline_mode=pl.Buffered(1))
            for w in weights
        ]
    else:
        weight_specs = [pl.BlockSpec(w.shape, lambda i: (0, 0))
                        for w in weights]

    hid_p = w2.shape[0]
    wide = w5.shape[1]
    flops = 2 * bp * ((state_dim + action_dim) * hid_p
                      + 2 * hid_p * hid_p
                      + 2 * hid_p * wide
                      + hid_p * _OUT_PAD)
    bytes_accessed = (x.size * x.dtype.itemsize
                      + a.size * a.dtype.itemsize
                      + sum(w.size * w.dtype.itemsize for w in weights)
                      + bp * _OUT_PAD * jnp.dtype(out_dtype).itemsize)

    out = pl.pallas_call(
        _critic_kernel,
        out_shape=jax.ShapeDtypeStruct((bp, _OUT_PAD), out_dtype),
        grid_spec=pltpu.PrefetchScalarGridSpec(
            num_scalar_prefetch=0,
            grid=(grid_n,),
            in_specs=[pl.BlockSpec((tile_b, state_dim), lambda i: (i, 0)),
                      pl.BlockSpec((tile_b, action_dim), lambda i: (i, 0))]
                     + weight_specs,
            out_specs=pl.BlockSpec((tile_b, _OUT_PAD), lambda i: (i, 0)),
        ),
        compiler_params=pltpu.CompilerParams(
            dimension_semantics=("parallel",),
            vmem_limit_bytes=vmem_limit_bytes,
        ),
        cost_estimate=pl.CostEstimate(flops=flops, transcendentals=0,
                                      bytes_accessed=bytes_accessed),
    )(x, a, *weights)

    return out[:B, :1].astype(jnp.float32)


def critic_forward(x, a, kparams, *, device_kind=None):
    """x: [B, state_dim], a: [B, action_dim]; kparams from pad_params_for_kernel.

    Tile/VMEM config is resolved here (outside jit) from the device kind, or
    from an explicitly supplied `device_kind` (AOT / mock compile safe).
    Returns q: [B, 1] (float32)."""
    if device_kind is None:
        device_kind = _device_kind()
    tile_b, vmem_limit, is_v7 = _tile_config(x.shape[0], device_kind)
    return _critic_forward_impl(x, a, tuple(kparams),
                                tile_b=tile_b,
                                vmem_limit_bytes=vmem_limit,
                                single_buffer_weights=is_v7)


def init_critic_params(key, state_dim, action_dim, hidden_dim):
    """Unpadded params in [in, out] layout (transposed vs. PyTorch's [out, in]),
    mimicking nn.Linear's default U(-1/sqrt(fan_in), +1/sqrt(fan_in)) init."""
    dims = [
        (state_dim + action_dim, hidden_dim),  # fc1
        (hidden_dim, hidden_dim),              # fc2
        (hidden_dim, hidden_dim),              # fc3
        (hidden_dim, 1024),                    # fc5
        (1024, hidden_dim),                    # fc6
        (hidden_dim, 1),                       # fc4
    ]
    params = []
    for fan_in, fan_out in dims:
        key, kw, kb = jax.random.split(key, 3)
        bound = 1.0 / math.sqrt(fan_in)
        w = jax.random.uniform(kw, (fan_in, fan_out), jnp.float32, -bound, bound)
        b = jax.random.uniform(kb, (fan_out,), jnp.float32, -bound, bound)
        params.extend([w, b])
    return tuple(params)


def pad_params_for_kernel(params, state_dim, action_dim, *,
                          weight_dtype=jnp.bfloat16):
    """Zero-pad feature dims to multiples of 128 lanes, split fc1, cast weights.

    Zero padding is exact: padded hidden units get z=0 -> relu(0)=0 and the
    next layer's corresponding weight rows are zero, so they contribute nothing.
    Biases stay f32 (elementwise math is f32 in the kernel). bf16 weights are
    the recommended default (halved DMA; needed for MXU rate, esp. v5e)."""
    (w1, b1, w2, b2, w3, b3, w5, b5, w6, b6, w4, b4) = params

    def pad_w(w, rows, cols):
        out = jnp.zeros((rows, cols), jnp.float32)
        out = out.at[:w.shape[0], :w.shape[1]].set(w)
        return out.astype(weight_dtype)

    def pad_b(b, cols):
        out = jnp.zeros((1, cols), jnp.float32)
        return out.at[0, :b.shape[0]].set(b)

    hidden = w2.shape[0]
    hid_p = _round_up(hidden, _LANE)
    wide_p = _round_up(w5.shape[1], _LANE)      # 1024 -> already aligned

    w1x = pad_w(w1[:state_dim], state_dim, hid_p)
    w1a = pad_w(w1[state_dim:], action_dim, hid_p)
    return (w1x, w1a, pad_b(b1, hid_p),
            pad_w(w2, hid_p, hid_p), pad_b(b2, hid_p),
            pad_w(w3, hid_p, hid_p), pad_b(b3, hid_p),
            pad_w(w5, hid_p, wide_p), pad_b(b5, wide_p),
            pad_w(w6, wide_p, hid_p), pad_b(b6, hid_p),
            pad_w(w4, hid_p, _OUT_PAD), pad_b(b4, _OUT_PAD))


def critic_reference(x, a, params, compute_dtype=jnp.float32):
    """Pure-JAX reference mirroring the kernel's precision pattern."""
    (w1, b1, w2, b2, w3, b3, w5, b5, w6, b6, w4, b4) = params

    def dense(h, w, b):
        z = jnp.dot(h.astype(compute_dtype), w.astype(compute_dtype),
                    preferred_element_type=jnp.float32)
        return z + b

    h = jnp.concatenate([x, a], axis=1)
    h = jnp.maximum(dense(h, w1, b1), 0.0)
    h = jnp.maximum(dense(h, w2, b2), 0.0)
    h = jnp.maximum(dense(h, w3, b3), 0.0)
    h = jnp.maximum(dense(h, w5, b5), 0.0)
    h = jnp.maximum(dense(h, w6, b6), 0.0)
    return dense(h, w4, b4)


if __name__ == "__main__":
    # Small shapes consistent with Critic(state_dim, action_dim, hidden_dim).
    batch, state_dim, action_dim, hidden_dim = 8, 16, 8, 32

    key = jax.random.PRNGKey(0)
    key, kx, ka, kp = jax.random.split(key, 4)
    x = jax.random.normal(kx, (batch, state_dim), jnp.float32)
    a = jax.random.normal(ka, (batch, action_dim), jnp.float32)
    params = init_critic_params(kp, state_dim, action_dim, hidden_dim)

    # --- f32 weights: exact check against the reference (f32 output path) ---
    kparams_f32 = pad_params_for_kernel(params, state_dim, action_dim,
                                        weight_dtype=jnp.float32)
    q = jax.block_until_ready(critic_forward(x, a, kparams_f32))
    q_ref = critic_reference(x, a, params)
    assert q.shape == (batch, 1), q.shape
    assert jnp.allclose(q, q_ref, atol=1e-4, rtol=1e-4), (q, q_ref)

    # --- bf16 weights (production path): bf16 matmuls + bf16 writeback,
    #     f32 accumulation / bias / ReLU ---
    kparams_bf16 = pad_params_for_kernel(params, state_dim, action_dim,
                                         weight_dtype=jnp.bfloat16)
    q_bf16 = jax.block_until_ready(critic_forward(x, a, kparams_bf16))
    q_ref_bf16 = critic_reference(x, a, params, compute_dtype=jnp.bfloat16)
    assert jnp.allclose(q_bf16, q_ref_bf16, atol=1e-2, rtol=1e-2), (
        q_bf16, q_ref_bf16)

    print("KERNEL_OK")
</pallas_src>

<mosaic_0001>
module attributes {stable_mosaic.version = 11 : i64} {
  func.func @_critic_kernel(%arg0: i32, %arg1: memref<8x16xf32, #tpu.memory_space<vmem>>, %arg2: memref<8x8xf32, #tpu.memory_space<vmem>>, %arg3: memref<16x128xf32, #tpu.memory_space<vmem>>, %arg4: memref<8x128xf32, #tpu.memory_space<vmem>>, %arg5: memref<1x128xf32, #tpu.memory_space<vmem>>, %arg6: memref<128x128xf32, #tpu.memory_space<vmem>>, %arg7: memref<1x128xf32, #tpu.memory_space<vmem>>, %arg8: memref<128x128xf32, #tpu.memory_space<vmem>>, %arg9: memref<1x128xf32, #tpu.memory_space<vmem>>, %arg10: memref<128x1024xf32, #tpu.memory_space<vmem>>, %arg11: memref<1x1024xf32, #tpu.memory_space<vmem>>, %arg12: memref<1024x128xf32, #tpu.memory_space<vmem>>, %arg13: memref<1x128xf32, #tpu.memory_space<vmem>>, %arg14: memref<128x128xf32, #tpu.memory_space<vmem>>, %arg15: memref<1x128xf32, #tpu.memory_space<vmem>>, %arg16: memref<8x128xf32, #tpu.memory_space<vmem>>) attributes {dimension_semantics = [#tpu.dimension_semantics<parallel>], iteration_bounds = array<i64: 1>, scalar_prefetch = 0 : i64, scratch_operands = 0 : i64, tpu.core_type = #tpu.core_type<tc>, window_params = [{transform_indices = @transform_0, window_bounds = array<i64: 8, 16>}, {transform_indices = @transform_1, window_bounds = array<i64: 8, 8>}, {pipeline_mode = #tpu.pipeline_mode<synchronous>, transform_indices = @transform_2, window_bounds = array<i64: 16, 128>}, {pipeline_mode = #tpu.pipeline_mode<synchronous>, transform_indices = @transform_3, window_bounds = array<i64: 8, 128>}, {pipeline_mode = #tpu.pipeline_mode<synchronous>, transform_indices = @transform_4, window_bounds = array<i64: 1, 128>}, {pipeline_mode = #tpu.pipeline_mode<synchronous>, transform_indices = @transform_5, window_bounds = array<i64: 128, 128>}, {pipeline_mode = #tpu.pipeline_mode<synchronous>, transform_indices = @transform_6, window_bounds = array<i64: 1, 128>}, {pipeline_mode = #tpu.pipeline_mode<synchronous>, transform_indices = @transform_7, window_bounds = array<i64: 128, 128>}, {pipeline_mode = #tpu.pipeline_mode<synchronous>, transform_indices = @transform_8, window_bounds = array<i64: 1, 128>}, {pipeline_mode = #tpu.pipeline_mode<synchronous>, transform_indices = @transform_9, window_bounds = array<i64: 128, 1024>}, {pipeline_mode = #tpu.pipeline_mode<synchronous>, transform_indices = @transform_10, window_bounds = array<i64: 1, 1024>}, {pipeline_mode = #tpu.pipeline_mode<synchronous>, transform_indices = @transform_11, window_bounds = array<i64: 1024, 128>}, {pipeline_mode = #tpu.pipeline_mode<synchronous>, transform_indices = @transform_12, window_bounds = array<i64: 1, 128>}, {pipeline_mode = #tpu.pipeline_mode<synchronous>, transform_indices = @transform_13, window_bounds = array<i64: 128, 128>}, {pipeline_mode = #tpu.pipeline_mode<synchronous>, transform_indices = @transform_14, window_bounds = array<i64: 1, 128>}, {transform_indices = @transform_15, window_bounds = array<i64: 8, 128>}]} {
    %c0 = arith.constant 0 : index
    %c0_0 = arith.constant 0 : index
    %0 = vector.load %arg1[%c0, %c0_0] : memref<8x16xf32, #tpu.memory_space<vmem>>, vector<8x16xf32>
    %c0_1 = arith.constant 0 : index
    %c0_2 = arith.constant 0 : index
    %1 = vector.load %arg3[%c0_1, %c0_2] : memref<16x128xf32, #tpu.memory_space<vmem>>, vector<16x128xf32>
    %cst = arith.constant dense<0.000000e+00> : vector<8x128xf32>
    %2 = tpu.matmul %0, %1, %cst {dimension_numbers = #tpu.dot_dimension_numbers<[1], [0], [0], [1], [0, 0, 1, 1], [], []>} : vector<8x16xf32>, vector<16x128xf32>, vector<8x128xf32> -> vector<8x128xf32>
    %c0_3 = arith.constant 0 : index
    %c0_4 = arith.constant 0 : index
    %3 = vector.load %arg2[%c0_3, %c0_4] : memref<8x8xf32, #tpu.memory_space<vmem>>, vector<8x8xf32>
    %c0_5 = arith.constant 0 : index
    %c0_6 = arith.constant 0 : index
    %4 = vector.load %arg4[%c0_5, %c0_6] : memref<8x128xf32, #tpu.memory_space<vmem>>, vector<8x128xf32>
    %cst_7 = arith.constant dense<0.000000e+00> : vector<8x128xf32>
    %5 = tpu.matmul %3, %4, %cst_7 {dimension_numbers = #tpu.dot_dimension_numbers<[1], [0], [0], [1], [0, 0, 1, 1], [], []>} : vector<8x8xf32>, vector<8x128xf32>, vector<8x128xf32> -> vector<8x128xf32>
    %6 = arith.addf %2, %5 : vector<8x128xf32>
    %c0_8 = arith.constant 0 : index
    %c0_9 = arith.constant 0 : index
    %7 = vector.load %arg5[%c0_8, %c0_9] : memref<1x128xf32, #tpu.memory_space<vmem>>, vector<1x128xf32>
    %8 = vector.broadcast %7 : vector<1x128xf32> to vector<8x128xf32>
    %9 = arith.addf %6, %8 : vector<8x128xf32>
    %cst_10 = arith.constant 0.000000e+00 : f32
    %10 = vector.broadcast %cst_10 : f32 to vector<8x128xf32>
    %11 = arith.maximumf %9, %10 : vector<8x128xf32>
    %c0_11 = arith.constant 0 : index
    %c0_12 = arith.constant 0 : index
    %12 = vector.load %arg6[%c0_11, %c0_12] : memref<128x128xf32, #tpu.memory_space<vmem>>, vector<128x128xf32>
    %cst_13 = arith.constant dense<0.000000e+00> : vector<8x128xf32>
    %13 = tpu.matmul %11, %12, %cst_13 {dimension_numbers = #tpu.dot_dimension_numbers<[1], [0], [0], [1], [0, 0, 1, 1], [], []>} : vector<8x128xf32>, vector<128x128xf32>, vector<8x128xf32> -> vector<8x128xf32>
    %c0_14 = arith.constant 0 : index
    %c0_15 = arith.constant 0 : index
    %14 = vector.load %arg7[%c0_14, %c0_15] : memref<1x128xf32, #tpu.memory_space<vmem>>, vector<1x128xf32>
    %15 = vector.broadcast %14 : vector<1x128xf32> to vector<8x128xf32>
    %16 = arith.addf %13, %15 : vector<8x128xf32>
    %cst_16 = arith.constant 0.000000e+00 : f32
    %17 = vector.broadcast %cst_16 : f32 to vector<8x128xf32>
    %18 = arith.maximumf %16, %17 : vector<8x128xf32>
    %c0_17 = arith.constant 0 : index
    %c0_18 = arith.constant 0 : index
    %19 = vector.load %arg8[%c0_17, %c0_18] : memref<128x128xf32, #tpu.memory_space<vmem>>, vector<128x128xf32>
    %cst_19 = arith.constant dense<0.000000e+00> : vector<8x128xf32>
    %20 = tpu.matmul %18, %19, %cst_19 {dimension_numbers = #tpu.dot_dimension_numbers<[1], [0], [0], [1], [0, 0, 1, 1], [], []>} : vector<8x128xf32>, vector<128x128xf32>, vector<8x128xf32> -> vector<8x128xf32>
    %c0_20 = arith.constant 0 : index
    %c0_21 = arith.constant 0 : index
    %21 = vector.load %arg9[%c0_20, %c0_21] : memref<1x128xf32, #tpu.memory_space<vmem>>, vector<1x128xf32>
    %22 = vector.broadcast %21 : vector<1x128xf32> to vector<8x128xf32>
    %23 = arith.addf %20, %22 : vector<8x128xf32>
    %cst_22 = arith.constant 0.000000e+00 : f32
    %24 = vector.broadcast %cst_22 : f32 to vector<8x128xf32>
    %25 = arith.maximumf %23, %24 : vector<8x128xf32>
    %c0_23 = arith.constant 0 : index
    %c0_24 = arith.constant 0 : index
    %26 = vector.load %arg10[%c0_23, %c0_24] : memref<128x1024xf32, #tpu.memory_space<vmem>>, vector<128x1024xf32>
    %cst_25 = arith.constant dense<0.000000e+00> : vector<8x1024xf32>
    %27 = tpu.matmul %25, %26, %cst_25 {dimension_numbers = #tpu.dot_dimension_numbers<[1], [0], [0], [1], [0, 0, 1, 1], [], []>} : vector<8x128xf32>, vector<128x1024xf32>, vector<8x1024xf32> -> vector<8x1024xf32>
    %c0_26 = arith.constant 0 : index
    %c0_27 = arith.constant 0 : index
    %28 = vector.load %arg11[%c0_26, %c0_27] : memref<1x1024xf32, #tpu.memory_space<vmem>>, vector<1x1024xf32>
    %29 = vector.broadcast %28 : vector<1x1024xf32> to vector<8x1024xf32>
    %30 = arith.addf %27, %29 : vector<8x1024xf32>
    %cst_28 = arith.constant 0.000000e+00 : f32
    %31 = vector.broadcast %cst_28 : f32 to vector<8x1024xf32>
    %32 = arith.maximumf %30, %31 : vector<8x1024xf32>
    %c0_29 = arith.constant 0 : index
    %c0_30 = arith.constant 0 : index
    %33 = vector.load %arg12[%c0_29, %c0_30] : memref<1024x128xf32, #tpu.memory_space<vmem>>, vector<1024x128xf32>
    %cst_31 = arith.constant dense<0.000000e+00> : vector<8x128xf32>
    %34 = tpu.matmul %32, %33, %cst_31 {dimension_numbers = #tpu.dot_dimension_numbers<[1], [0], [0], [1], [0, 0, 1, 1], [], []>} : vector<8x1024xf32>, vector<1024x128xf32>, vector<8x128xf32> -> vector<8x128xf32>
    %c0_32 = arith.constant 0 : index
    %c0_33 = arith.constant 0 : index
    %35 = vector.load %arg13[%c0_32, %c0_33] : memref<1x128xf32, #tpu.memory_space<vmem>>, vector<1x128xf32>
    %36 = vector.broadcast %35 : vector<1x128xf32> to vector<8x128xf32>
    %37 = arith.addf %34, %36 : vector<8x128xf32>
    %cst_34 = arith.constant 0.000000e+00 : f32
    %38 = vector.broadcast %cst_34 : f32 to vector<8x128xf32>
    %39 = arith.maximumf %37, %38 : vector<8x128xf32>
    %c0_35 = arith.constant 0 : index
    %c0_36 = arith.constant 0 : index
    %40 = vector.load %arg14[%c0_35, %c0_36] : memref<128x128xf32, #tpu.memory_space<vmem>>, vector<128x128xf32>
    %cst_37 = arith.constant dense<0.000000e+00> : vector<8x128xf32>
    %41 = tpu.matmul %39, %40, %cst_37 {dimension_numbers = #tpu.dot_dimension_numbers<[1], [0], [0], [1], [0, 0, 1, 1], [], []>} : vector<8x128xf32>, vector<128x128xf32>, vector<8x128xf32> -> vector<8x128xf32>
    %c0_38 = arith.constant 0 : index
    %c0_39 = arith.constant 0 : index
    %42 = vector.load %arg15[%c0_38, %c0_39] : memref<1x128xf32, #tpu.memory_space<vmem>>, vector<1x128xf32>
    %43 = vector.broadcast %42 : vector<1x128xf32> to vector<8x128xf32>
    %44 = arith.addf %41, %43 : vector<8x128xf32>
    %c0_40 = arith.constant 0 : index
    %c0_41 = arith.constant 0 : index
    %45 = vector.load %arg16[%c0_40, %c0_41] : memref<8x128xf32, #tpu.memory_space<vmem>>, vector<8x128xf32>
    tpu.vector_store %arg16[%c0_40, %c0_41], %44 {strides = array<i32>} : memref<8x128xf32, #tpu.memory_space<vmem>>, vector<8x128xf32>,
    return
  }
  func.func @transform_0(%arg0: i32) -> (i32, i32) {
    %c0_i32 = arith.constant 0 : i32
    %c0_i32_0 = arith.constant 0 : i32
    return %arg0, %c0_i32 : i32, i32
  }
  func.func @transform_1(%arg0: i32) -> (i32, i32) {
    %c0_i32 = arith.constant 0 : i32
    %c0_i32_0 = arith.constant 0 : i32
    return %arg0, %c0_i32 : i32, i32
  }
  func.func @transform_2(%arg0: i32) -> (i32, i32) {
    %c0_i32 = arith.constant 0 : i32
    %c0_i32_0 = arith.constant 0 : i32
    %c0_i32_1 = arith.constant 0 : i32
    return %c0_i32, %c0_i32_0 : i32, i32
  }
  func.func @transform_3(%arg0: i32) -> (i32, i32) {
    %c0_i32 = arith.constant 0 : i32
    %c0_i32_0 = arith.constant 0 : i32
    %c0_i32_1 = arith.constant 0 : i32
    return %c0_i32, %c0_i32_0 : i32, i32
  }
  func.func @transform_4(%arg0: i32) -> (i32, i32) {
    %c0_i32 = arith.constant 0 : i32
    %c0_i32_0 = arith.constant 0 : i32
    %c0_i32_1 = arith.constant 0 : i32
    return %c0_i32, %c0_i32_0 : i32, i32
  }
  func.func @transform_5(%arg0: i32) -> (i32, i32) {
    %c0_i32 = arith.constant 0 : i32
    %c0_i32_0 = arith.constant 0 : i32
    %c0_i32_1 = arith.constant 0 : i32
    return %c0_i32, %c0_i32_0 : i32, i32
  }
  func.func @transform_6(%arg0: i32) -> (i32, i32) {
    %c0_i32 = arith.constant 0 : i32
    %c0_i32_0 = arith.constant 0 : i32
    %c0_i32_1 = arith.constant 0 : i32
    return %c0_i32, %c0_i32_0 : i32, i32
  }
  func.func @transform_7(%arg0: i32) -> (i32, i32) {
    %c0_i32 = arith.constant 0 : i32
    %c0_i32_0 = arith.constant 0 : i32
    %c0_i32_1 = arith.constant 0 : i32
    return %c0_i32, %c0_i32_0 : i32, i32
  }
  func.func @transform_8(%arg0: i32) -> (i32, i32) {
    %c0_i32 = arith.constant 0 : i32
    %c0_i32_0 = arith.constant 0 : i32
    %c0_i32_1 = arith.constant 0 : i32
    return %c0_i32, %c0_i32_0 : i32, i32
  }
  func.func @transform_9(%arg0: i32) -> (i32, i32) {
    %c0_i32 = arith.constant 0 : i32
    %c0_i32_0 = arith.constant 0 : i32
    %c0_i32_1 = arith.constant 0 : i32
    return %c0_i32, %c0_i32_0 : i32, i32
  }
  func.func @transform_10(%arg0: i32) -> (i32, i32) {
    %c0_i32 = arith.constant 0 : i32
    %c0_i32_0 = arith.constant 0 : i32
    %c0_i32_1 = arith.constant 0 : i32
    return %c0_i32, %c0_i32_0 : i32, i32
  }
  func.func @transform_11(%arg0: i32) -> (i32, i32) {
    %c0_i32 = arith.constant 0 : i32
    %c0_i32_0 = arith.constant 0 : i32
    %c0_i32_1 = arith.constant 0 : i32
    return %c0_i32, %c0_i32_0 : i32, i32
  }
  func.func @transform_12(%arg0: i32) -> (i32, i32) {
    %c0_i32 = arith.constant 0 : i32
    %c0_i32_0 = arith.constant 0 : i32
    %c0_i32_1 = arith.constant 0 : i32
    return %c0_i32, %c0_i32_0 : i32, i32
  }
  func.func @transform_13(%arg0: i32) -> (i32, i32) {
    %c0_i32 = arith.constant 0 : i32
    %c0_i32_0 = arith.constant 0 : i32
    %c0_i32_1 = arith.constant 0 : i32
    return %c0_i32, %c0_i32_0 : i32, i32
  }
  func.func @transform_14(%arg0: i32) -> (i32, i32) {
    %c0_i32 = arith.constant 0 : i32
    %c0_i32_0 = arith.constant 0 : i32
    %c0_i32_1 = arith.constant 0 : i32
    return %c0_i32, %c0_i32_0 : i32, i32
  }
  func.func @transform_15(%arg0: i32) -> (i32, i32) {
    %c0_i32 = arith.constant 0 : i32
    %c0_i32_0 = arith.constant 0 : i32
    return %arg0, %c0_i32 : i32, i32
  }
}

</mosaic_0001>

<llo_original>
// kernel: _critic_forward_impl.1
$region0: #{_critic_forward_impl.1}
  #allocation0 [shape = 'u32[]', space=smem, size = 0x4, offset = 0x4, fixed_abs, tag = 'smem constant byte address 0x4 - core index']
  #allocation1 [shape = 'u32[72,128]{1,0:T(1,128)}', space=vmem, size = 0x9000, scoped, tag = 'internal scratch']
  %s0 = inlined_call_operand.hbm [shape: f32[8,16], index: 0, kind: input, shape index: {}]
  %s1 = inlined_call_operand.hbm [shape: f32[8,8], index: 1, kind: input, shape index: {}]
  %s2 = inlined_call_operand.hbm [shape: f32[16,128], index: 2, kind: input, shape index: {}]
  %s3 = inlined_call_operand.hbm [shape: f32[8,128], index: 3, kind: input, shape index: {}]
  %s4 = inlined_call_operand.vmem [shape: f32[1,128], index: 4, kind: input, shape index: {}]
  %s5 = inlined_call_operand.hbm [shape: f32[128,128], index: 5, kind: input, shape index: {}]
  %s6 = inlined_call_operand.hbm [shape: f32[1,128], index: 6, kind: input, shape index: {}]
  %s7 = inlined_call_operand.hbm [shape: f32[128,128], index: 7, kind: input, shape index: {}]
  %s8 = inlined_call_operand.hbm [shape: f32[1,128], index: 8, kind: input, shape index: {}]
  %s9 = inlined_call_operand.hbm [shape: f32[128,1024], index: 9, kind: input, shape index: {}]
  %s10 = inlined_call_operand.vmem [shape: f32[1,1024], index: 10, kind: input, shape index: {}]
  %s11 = inlined_call_operand.hbm [shape: f32[1024,128], index: 11, kind: input, shape index: {}]
  %s12 = inlined_call_operand.vmem [shape: f32[1,128], index: 12, kind: input, shape index: {}]
  %s13 = inlined_call_operand.hbm [shape: f32[128,128], index: 13, kind: input, shape index: {}]
  %s14 = inlined_call_operand.vmem [shape: f32[1,128], index: 14, kind: input, shape index: {}]
  %s15 = inlined_call_operand.vmem [shape: f32[8,128], index: 15, kind: output, shape index: {}]
  %s16 = sld [smem:[#allocation0]]
  $region114: #{_critic_forward_impl.1} parent=0
    _
  %s18 = ssub.s32 1, %s16
  %s19 = scalar_select 0, %s18, %s16
  $region1: #{_critic_forward_impl.1} parent=0
    #allocation2 [shape = 'u8[4096]{0}', space=vmem, size = 0x1000, scoped, tag = 'input window, operand 0, single buffered']
    #allocation3 [shape = 's32[1]{0}', space=sflag, size = 0x4, scoped, tag = 'scoped memory for _critic_forward_impl.1']
    #allocation4 [shape = 'u8[4096]{0}', space=vmem, size = 0x1000, scoped, tag = 'input window, operand 1, single buffered']
    #allocation5 [shape = 's32[1]{0}', space=sflag, size = 0x4, scoped, tag = 'scoped memory for _critic_forward_impl.1']
    #allocation6 [shape = 'u8[8192]{0}', space=vmem, size = 0x2000, scoped, tag = 'input window, operand 2, single buffered']
    #allocation7 [shape = 'u8[4096]{0}', space=vmem, size = 0x1000, scoped, tag = 'input window, operand 3, single buffered']
    #allocation8 [shape = 's32[1]{0}', space=sflag, size = 0x4, scoped, tag = 'scoped memory for _critic_forward_impl.1']
    #allocation9 [shape = 'u8[65536]{0}', space=vmem, size = 0x10000, scoped, tag = 'input window, operand 5, single buffered']
    #allocation10 [shape = 'u8[512]{0}', space=vmem, size = 0x400, scoped, tag = 'input window, operand 6, single buffered']
    #allocation11 [shape = 's32[1]{0}', space=sflag, size = 0x4, scoped, tag = 'scoped memory for _critic_forward_impl.1']
    #allocation12 [shape = 'u8[65536]{0}', space=vmem, size = 0x10000, scoped, tag = 'input window, operand 7, single buffered']
    #allocation13 [shape = 'u8[512]{0}', space=vmem, size = 0x400, scoped, tag = 'input window, operand 8, single buffered']
    #allocation14 [shape = 's32[1]{0}', space=sflag, size = 0x4, scoped, tag = 'scoped memory for _critic_forward_impl.1']
    #allocation15 [shape = 'u8[524288]{0}', space=vmem, size = 0x80000, scoped, tag = 'input window, operand 9, single buffered']
    #allocation16 [shape = 'u8[524288]{0}', space=vmem, size = 0x80000, scoped, tag = 'input window, operand 11, single buffered']
    #allocation17 [shape = 's32[1]{0}', space=sflag, size = 0x4, scoped, tag = 'scoped memory for _critic_forward_impl.1']
    #allocation18 [shape = 'u8[65536]{0}', space=vmem, size = 0x10000, scoped, tag = 'input window, operand 13, single buffered']
    %20 = vsyncpa [#allocation3], 0
    %21 = vsyncpa [#allocation5], 0
    %22 = vsyncpa [#allocation8], 0
    %23 = vsyncpa [#allocation11], 0
    %24 = vsyncpa [#allocation14], 0
    %25 = vsyncpa [#allocation17], 0
    // Predicated region
    $region2: #{_critic_forward_impl.1} parent=1 // pred_check
      _
    $region3: #{_critic_forward_impl.1} parent=1 // pred_check_branch
      %27 = sbr.rel (0) target = $region5
    $region4: #{_critic_forward_impl.1} parent=1 // pred_region
      %29 = vsyncadd [#allocation3], 0
      %s31 = sshll.u32 %s0, 4
      %s32 = int_to_ptr.hbm [resolvable:$true] %s31
      %s33 = sshll.u32 [#allocation2], 4
      %s34 = int_to_ptr.vmem [resolvable:$true] %s33
      %36 = dma.hbm_to_vmem [thread:$0]  %s32, 128, %s34, [#allocation3]
    $region5: #{_critic_forward_impl.1} parent=1 // pred_fallthru
      _
    // Predicated region
    $region6: #{_critic_forward_impl.1} parent=1 // pred_check
      _
    $region7: #{_critic_forward_impl.1} parent=1 // pred_check_branch
      %38 = sbr.rel (0) target = $region9
    $region8: #{_critic_forward_impl.1} parent=1 // pred_region
      %40 = vsyncadd [#allocation5], 0
      %s42 = sshll.u32 %s1, 4
      %s43 = int_to_ptr.hbm [resolvable:$true] %s42
      %s44 = sshll.u32 [#allocation4], 4
      %s45 = int_to_ptr.vmem [resolvable:$true] %s44
      %47 = dma.hbm_to_vmem [thread:$0]  %s43, 128, %s45, [#allocation5]
    $region9: #{_critic_forward_impl.1} parent=1 // pred_fallthru
      _
    // Predicated region
    $region10: #{_critic_forward_impl.1} parent=1 // pred_check
      _
    $region11: #{_critic_forward_impl.1} parent=1 // pred_check_branch
      %49 = sbr.rel (0) target = $region13
    $region12: #{_critic_forward_impl.1} parent=1 // pred_region
      %51 = vsyncadd [#allocation5], 0
      %s52 = sshll.u32 %s2, 4
      %s53 = int_to_ptr.hbm [resolvable:$true] %s52
      %s54 = sshll.u32 [#allocation6], 4
      %s55 = int_to_ptr.vmem [resolvable:$true] %s54
      %60 = dma.hbm_to_vmem [thread:$0]  %s53, 256, %s55, [#allocation5], 128, 128, 8
    $region13: #{_critic_forward_impl.1} parent=1 // pred_fallthru
      _
    // Predicated region
    $region14: #{_critic_forward_impl.1} parent=1 // pred_check
      _
    $region15: #{_critic_forward_impl.1} parent=1 // pred_check_branch
      %62 = sbr.rel (0) target = $region17
    $region16: #{_critic_forward_impl.1} parent=1 // pred_region
      %64 = vsyncadd [#allocation8], 0
      %s66 = sshll.u32 %s3, 4
      %s67 = int_to_ptr.hbm [resolvable:$true] %s66
      %s68 = sshll.u32 [#allocation7], 4
      %s69 = int_to_ptr.vmem [resolvable:$true] %s68
      %71 = dma.hbm_to_vmem [thread:$0]  %s67, 128, %s69, [#allocation8]
    $region17: #{_critic_forward_impl.1} parent=1 // pred_fallthru
      _
    // Predicated region
    $region18: #{_critic_forward_impl.1} parent=1 // pred_check
      _
    $region19: #{_critic_forward_impl.1} parent=1 // pred_check_branch
      %73 = sbr.rel (0) target = $region21
    $region20: #{_critic_forward_impl.1} parent=1 // pred_region
      _
    $region21: #{_critic_forward_impl.1} parent=1 // pred_fallthru
      _
    // Predicated region
    $region22: #{_critic_forward_impl.1} parent=1 // pred_check
      _
    $region23: #{_critic_forward_impl.1} parent=1 // pred_check_branch
      %75 = sbr.rel (0) target = $region25
    $region24: #{_critic_forward_impl.1} parent=1 // pred_region
      %77 = vsyncadd [#allocation8], 0
      %s78 = sshll.u32 %s5, 4
      %s79 = int_to_ptr.hbm [resolvable:$true] %s78
      %s80 = sshll.u32 [#allocation9], 4
      %s81 = int_to_ptr.vmem [resolvable:$true] %s80
      %86 = dma.hbm_to_vmem [thread:$0]  %s79, 2048, %s81, [#allocation8], 128, 128, 8
    $region25: #{_critic_forward_impl.1} parent=1 // pred_fallthru
      _
    // Predicated region
    $region26: #{_critic_forward_impl.1} parent=1 // pred_check
      _
    $region27: #{_critic_forward_impl.1} parent=1 // pred_check_branch
      %88 = sbr.rel (0) target = $region29
    $region28: #{_critic_forward_impl.1} parent=1 // pred_region
      %90 = vsyncadd [#allocation11], 0
      %s92 = sshll.u32 %s6, 4
      %s93 = int_to_ptr.hbm [resolvable:$true] %s92
      %s94 = sshll.u32 [#allocation10], 4
      %s95 = int_to_ptr.vmem [resolvable:$true] %s94
      %97 = dma.hbm_to_vmem [thread:$0]  %s93, 16, %s95, [#allocation11]
    $region29: #{_critic_forward_impl.1} parent=1 // pred_fallthru
      _
    // Predicated region
    $region30: #{_critic_forward_impl.1} parent=1 // pred_check
      _
    $region31: #{_critic_forward_impl.1} parent=1 // pred_check_branch
      %99 = sbr.rel (0) target = $region33
    $region32: #{_critic_forward_impl.1} parent=1 // pred_region
      %101 = vsyncadd [#allocation11], 0
      %s102 = sshll.u32 %s7, 4
      %s103 = int_to_ptr.hbm [resolvable:$true] %s102
      %s104 = sshll.u32 [#allocation12], 4
      %s105 = int_to_ptr.vmem [resolvable:$true] %s104
      %110 = dma.hbm_to_vmem [thread:$0]  %s103, 2048, %s105, [#allocation11], 128, 128, 8
    $region33: #{_critic_forward_impl.1} parent=1 // pred_fallthru
      _
    // Predicated region
    $region34: #{_critic_forward_impl.1} parent=1 // pred_check
      _
    $region35: #{_critic_forward_impl.1} parent=1 // pred_check_branch
      %112 = sbr.rel (0) target = $region37
    $region36: #{_critic_forward_impl.1} parent=1 // pred_region
      %114 = vsyncadd [#allocation14], 0
      %s116 = sshll.u32 %s8, 4
      %s117 = int_to_ptr.hbm [resolvable:$true] %s116
      %s118 = sshll.u32 [#allocation13], 4
      %s119 = int_to_ptr.vmem [resolvable:$true] %s118
      %121 = dma.hbm_to_vmem [thread:$0]  %s117, 16, %s119, [#allocation14]
    $region37: #{_critic_forward_impl.1} parent=1 // pred_fallthru
      _
    // Predicated region
    $region38: #{_critic_forward_impl.1} parent=1 // pred_check
      _
    $region39: #{_critic_forward_impl.1} parent=1 // pred_check_branch
      %123 = sbr.rel (0) target = $region41
    $region40: #{_critic_forward_impl.1} parent=1 // pred_region
      %125 = vsyncadd [#allocation14], 0
      %s126 = sshll.u32 %s9, 4
      %s127 = int_to_ptr.hbm [resolvable:$true] %s126
      %s128 = sshll.u32 [#allocation15], 4
      %s129 = int_to_ptr.vmem [resolvable:$true] %s128
      %134 = dma.hbm_to_vmem [thread:$0]  %s127, 16384, %s129, [#allocation14], 1024, 1024, 64
    $region41: #{_critic_forward_impl.1} parent=1 // pred_fallthru
      _
    // Predicated region
    $region42: #{_critic_forward_impl.1} parent=1 // pred_check
      _
    $region43: #{_critic_forward_impl.1} parent=1 // pred_check_branch
      %136 = sbr.rel (0) target = $region45
    $region44: #{_critic_forward_impl.1} parent=1 // pred_region
      _
    $region45: #{_critic_forward_impl.1} parent=1 // pred_fallthru
      _
    // Predicated region
    $region46: #{_critic_forward_impl.1} parent=1 // pred_check
      _
    $region47: #{_critic_forward_impl.1} parent=1 // pred_check_branch
      %138 = sbr.rel (0) target = $region49
    $region48: #{_critic_forward_impl.1} parent=1 // pred_region
      %140 = vsyncadd [#allocation17], 0
      %s141 = sshll.u32 %s11, 4
      %s142 = int_to_ptr.hbm [resolvable:$true] %s141
      %s143 = sshll.u32 [#allocation16], 4
      %s144 = int_to_ptr.vmem [resolvable:$true] %s143
      %149 = dma.hbm_to_vmem [thread:$0]  %s142, 16384, %s144, [#allocation17], 128, 128, 8
    $region49: #{_critic_forward_impl.1} parent=1 // pred_fallthru
      _
    // Predicated region
    $region50: #{_critic_forward_impl.1} parent=1 // pred_check
      _
    $region51: #{_critic_forward_impl.1} parent=1 // pred_check_branch
      %151 = sbr.rel (0) target = $region53
    $region52: #{_critic_forward_impl.1} parent=1 // pred_region
      _
    $region53: #{_critic_forward_impl.1} parent=1 // pred_fallthru
      _
    // Predicated region
    $region54: #{_critic_forward_impl.1} parent=1 // pred_check
      _
    $region55: #{_critic_forward_impl.1} parent=1 // pred_check_branch
      %153 = sbr.rel (0) target = $region57
    $region56: #{_critic_forward_impl.1} parent=1 // pred_region
      %155 = vsyncadd [#allocation17], 0
      %s156 = sshll.u32 %s13, 4
      %s157 = int_to_ptr.hbm [resolvable:$true] %s156
      %s158 = sshll.u32 [#allocation18], 4
      %s159 = int_to_ptr.vmem [resolvable:$true] %s158
      %164 = dma.hbm_to_vmem [thread:$0]  %s157, 2048, %s159, [#allocation17], 128, 128, 8
    $region57: #{_critic_forward_impl.1} parent=1 // pred_fallthru
      _
    // Predicated region
    $region58: #{_critic_forward_impl.1} parent=1 // pred_check
      _
    $region59: #{_critic_forward_impl.1} parent=1 // pred_check_branch
      %166 = sbr.rel (0) target = $region61
    $region60: #{_critic_forward_impl.1} parent=1 // pred_region
      _
    $region61: #{_critic_forward_impl.1} parent=1 // pred_fallthru
      _
    // Predicated region
    $region62: #{_critic_forward_impl.1} parent=1 // pred_check
      _
    $region63: #{_critic_forward_impl.1} parent=1 // pred_check_branch
      %168 = sbr.rel (0) target = $region65
    $region64: #{_critic_forward_impl.1} parent=1 // pred_region
      %170 = dma.done [#allocation3], 128
    $region65: #{_critic_forward_impl.1} parent=1 // pred_fallthru
      _
    // Predicated region
    $region66: #{_critic_forward_impl.1} parent=1 // pred_check
      _
    $region67: #{_critic_forward_impl.1} parent=1 // pred_check_branch
      %172 = sbr.rel (0) target = $region69
    $region68: #{_critic_forward_impl.1} parent=1 // pred_region
      %174 = dma.done [#allocation5], 128
    $region69: #{_critic_forward_impl.1} parent=1 // pred_fallthru
      _
    // Predicated region
    $region70: #{_critic_forward_impl.1} parent=1 // pred_check
      _
    $region71: #{_critic_forward_impl.1} parent=1 // pred_check_branch
      %176 = sbr.rel (0) target = $region73
    $region72: #{_critic_forward_impl.1} parent=1 // pred_region
      %178 = dma.done [#allocation5], 256
    $region73: #{_critic_forward_impl.1} parent=1 // pred_fallthru
      _
    // Predicated region
    $region74: #{_critic_forward_impl.1} parent=1 // pred_check
      _
    $region75: #{_critic_forward_impl.1} parent=1 // pred_check_branch
      %180 = sbr.rel (0) target = $region77
    $region76: #{_critic_forward_impl.1} parent=1 // pred_region
      %182 = dma.done [#allocation8], 128
    $region77: #{_critic_forward_impl.1} parent=1 // pred_fallthru
      _
    // Predicated region
    $region78: #{_critic_forward_impl.1} parent=1 // pred_check
      _
    $region79: #{_critic_forward_impl.1} parent=1 // pred_check_branch
      %184 = sbr.rel (0) target = $region81
    $region80: #{_critic_forward_impl.1} parent=1 // pred_region
      %186 = dma.done [#allocation8], 2048
    $region81: #{_critic_forward_impl.1} parent=1 // pred_fallthru
      _
    // Predicated region
    $region82: #{_critic_forward_impl.1} parent=1 // pred_check
      _
    $region83: #{_critic_forward_impl.1} parent=1 // pred_check_branch
      %188 = sbr.rel (0) target = $region85
    $region84: #{_critic_forward_impl.1} parent=1 // pred_region
      %190 = dma.done [#allocation11], 16
    $region85: #{_critic_forward_impl.1} parent=1 // pred_fallthru
      _
    // Predicated region
    $region86: #{_critic_forward_impl.1} parent=1 // pred_check
      _
    $region87: #{_critic_forward_impl.1} parent=1 // pred_check_branch
      %192 = sbr.rel (0) target = $region89
    $region88: #{_critic_forward_impl.1} parent=1 // pred_region
      %194 = dma.done [#allocation11], 2048
    $region89: #{_critic_forward_impl.1} parent=1 // pred_fallthru
      _
    // Predicated region
    $region90: #{_critic_forward_impl.1} parent=1 // pred_check
      _
    $region91: #{_critic_forward_impl.1} parent=1 // pred_check_branch
      %196 = sbr.rel (0) target = $region93
    $region92: #{_critic_forward_impl.1} parent=1 // pred_region
      %198 = dma.done [#allocation14], 16
    $region93: #{_critic_forward_impl.1} parent=1 // pred_fallthru
      _
    // Predicated region
    $region94: #{_critic_forward_impl.1} parent=1 // pred_check
      _
    $region95: #{_critic_forward_impl.1} parent=1 // pred_check_branch
      %200 = sbr.rel (0) target = $region97
    $region96: #{_critic_forward_impl.1} parent=1 // pred_region
      %202 = dma.done [#allocation14], 16384
    $region97: #{_critic_forward_impl.1} parent=1 // pred_fallthru
      _
    // Predicated region
    $region98: #{_critic_forward_impl.1} parent=1 // pred_check
      _
    $region99: #{_critic_forward_impl.1} parent=1 // pred_check_branch
      %204 = sbr.rel (0) target = $region101
    $region100: #{_critic_forward_impl.1} parent=1 // pred_region
      %206 = dma.done [#allocation17], 16384
    $region101: #{_critic_forward_impl.1} parent=1 // pred_fallthru
      _
    // Predicated region
    $region102: #{_critic_forward_impl.1} parent=1 // pred_check
      _
    $region103: #{_critic_forward_impl.1} parent=1 // pred_check_branch
      %208 = sbr.rel (0) target = $region105
    $region104: #{_critic_forward_impl.1} parent=1 // pred_region
      %210 = dma.done [#allocation17], 2048
    $region105: #{_critic_forward_impl.1} parent=1 // pred_fallthru
      _
    %v211 = vld [vmem:[#allocation2] sm:$0xff]
    %v212 = vld [vmem:[#allocation6] sm:$0xff]
    %v213 = vld [vmem:[#allocation6 + $0x8] sm:$0xff]
    %v214 = vld [vmem:[#allocation4] sm:$0xff]
    %v215 = vld [vmem:[#allocation7] sm:$0xff]
    %vm216 = vcmask 64512
    %v218 = vsel %vm216, %v214, 0
    %220 = vmatpush.msra.mxu0 0.0
    %221 = vmatpush.msra.mxu0 0.0
    %222 = vmatpush.msra.mxu0 0.0
    %223 = vmatpush.msra.mxu0 0.0
    %224 = vmatpush.msra.mxu0 0.0
    %225 = vmatpush.msra.mxu0 0.0
    %226 = vmatpush.msra.mxu0 0.0
    %227 = vmatpush.msra.mxu0 0.0
    %228 = vmatpush.msra.mxu0 0.0
    %229 = vmatpush.msra.mxu0 0.0
    %230 = vmatpush.msra.mxu0 0.0
    %231 = vmatpush.msra.mxu0 0.0
    %232 = vmatpush.msra.mxu0 0.0
    %233 = vmatpush.msra.mxu0 0.0
    %234 = vmatpush.msra.mxu0 0.0
    %235 = vmatpush.msra.mxu0 %v215
    %236 = vmatmul.f32.gmra.mxu0 %v218
    %v237 = vpop.f32.mrf.mxu0
    %v238 = vadd.f32 0.0, %v237
    %239 = vdwg.mxu0
    %vm240 = vcmask 130048
    %v242 = vsel %vm240, %v211, 0
    %244 = vmatpush.msra.mxu0 0.0
    %245 = vmatpush.msra.mxu0 0.0
    %246 = vmatpush.msra.mxu0 0.0
    %247 = vmatpush.msra.mxu0 0.0
    %248 = vmatpush.msra.mxu0 0.0
    %249 = vmatpush.msra.mxu0 0.0
    %250 = vmatpush.msra.mxu0 0.0
    %251 = vmatpush.msra.mxu0 0.0
    %252 = vmatpush.msra.mxu0 0.0
    %253 = vmatpush.msra.mxu0 0.0
    %254 = vmatpush.msra.mxu0 0.0
    %255 = vmatpush.msra.mxu0 0.0
    %256 = vmatpush.msra.mxu0 0.0
    %257 = vmatpush.msra.mxu0 0.0
    %258 = vmatpush.msra.mxu0 %v213
    %259 = vmatpush.msra.mxu0 %v212
    %260 = vmatmul.f32.gmra.mxu0 %v242
    %v261 = vpop.f32.mrf.mxu0
    %v262 = vadd.f32 %v238, %v261
    %263 = vdwg.mxu0
    %v264 = vld [vmem:[%s4] sm:$0x1]
    %v266 = vperm.slane %v264, 0
    %v268 = vadd.f32 %v262, %v266
    %v269 = vmax.f32 %v268, 0.0
    %v270 = vld [vmem:[#allocation9] sm:$0xff]
    %v271 = vld [vmem:[#allocation9 + $0x8] sm:$0xff]
    %v272 = vld [vmem:[#allocation9 + $0x10] sm:$0xff]
    %v273 = vld [vmem:[#allocation9 + $0x18] sm:$0xff]
    %v274 = vld [vmem:[#allocation9 + $0x20] sm:$0xff]
    %v275 = vld [vmem:[#allocation9 + $0x28] sm:$0xff]
    %v276 = vld [vmem:[#allocation9 + $0x30] sm:$0xff]
    %v277 = vld [vmem:[#allocation9 + $0x38] sm:$0xff]
    %v278 = vld [vmem:[#allocation9 + $0x40] sm:$0xff]
    %v279 = vld [vmem:[#allocation9 + $0x48] sm:$0xff]
    %v280 = vld [vmem:[#allocation9 + $0x50] sm:$0xff]
    %v281 = vld [vmem:[#allocation9 + $0x58] sm:$0xff]
    %v282 = vld [vmem:[#allocation9 + $0x60] sm:$0xff]
    %v283 = vld [vmem:[#allocation9 + $0x68] sm:$0xff]
    %v284 = vld [vmem:[#allocation9 + $0x70] sm:$0xff]
    %v285 = vld [vmem:[#allocation9 + $0x78] sm:$0xff]
    %v286 = vld [vmem:[#allocation10] sm:$0x1]
    %v288 = vperm.slane %v286, 0
    %290 = vmatpush.msra.mxu0 %v285
    %291 = vmatpush.msra.mxu0 %v284
    %292 = vmatpush.msra.mxu0 %v283
    %293 = vmatpush.msra.mxu0 %v282
    %294 = vmatpush.msra.mxu0 %v281
    %295 = vmatpush.msra.mxu0 %v280
    %296 = vmatpush.msra.mxu0 %v279
    %297 = vmatpush.msra.mxu0 %v278
    %298 = vmatpush.msra.mxu0 %v277
    %299 = vmatpush.msra.mxu0 %v276
    %300 = vmatpush.msra.mxu0 %v275
    %301 = vmatpush.msra.mxu0 %v274
    %302 = vmatpush.msra.mxu0 %v273
    %303 = vmatpush.msra.mxu0 %v272
    %304 = vmatpush.msra.mxu0 %v271
    %305 = vmatpush.msra.mxu0 %v270
    %306 = vmatmul.f32.gmra.mxu0 %v269
    %v307 = vpop.f32.mrf.mxu0
    %v308 = vadd.f32 %v288, %v307
    %309 = vdwg.mxu0
    %v310 = vmax.f32 %v308, 0.0
    %v311 = vld [vmem:[#allocation12] sm:$0xff]
    %v312 = vld [vmem:[#allocation12 + $0x8] sm:$0xff]
    %v313 = vld [vmem:[#allocation12 + $0x10] sm:$0xff]
    %v314 = vld [vmem:[#allocation12 + $0x18] sm:$0xff]
    %v315 = vld [vmem:[#allocation12 + $0x20] sm:$0xff]
    %v316 = vld [vmem:[#allocation12 + $0x28] sm:$0xff]
    %v317 = vld [vmem:[#allocation12 + $0x30] sm:$0xff]
    %v318 = vld [vmem:[#allocation12 + $0x38] sm:$0xff]
    %v319 = vld [vmem:[#allocation12 + $0x40] sm:$0xff]
    %v320 = vld [vmem:[#allocation12 + $0x48] sm:$0xff]
    %v321 = vld [vmem:[#allocation12 + $0x50] sm:$0xff]
    %v322 = vld [vmem:[#allocation12 + $0x58] sm:$0xff]
    %v323 = vld [vmem:[#allocation12 + $0x60] sm:$0xff]
    %v324 = vld [vmem:[#allocation12 + $0x68] sm:$0xff]
    %v325 = vld [vmem:[#allocation12 + $0x70] sm:$0xff]
    %v326 = vld [vmem:[#allocation12 + $0x78] sm:$0xff]
    %v327 = vld [vmem:[#allocation13] sm:$0x1]
    %v329 = vperm.slane %v327, 0
    %331 = vmatpush.msra.mxu0 %v326
    %332 = vmatpush.msra.mxu0 %v325
    %333 = vmatpush.msra.mxu0 %v324
    %334 = vmatpush.msra.mxu0 %v323
    %335 = vmatpush.msra.mxu0 %v322
    %336 = vmatpush.msra.mxu0 %v321
    %337 = vmatpush.msra.mxu0 %v320
    %338 = vmatpush.msra.mxu0 %v319
    %339 = vmatpush.msra.mxu0 %v318
    %340 = vmatpush.msra.mxu0 %v317
    %341 = vmatpush.msra.mxu0 %v316
    %342 = vmatpush.msra.mxu0 %v315
    %343 = vmatpush.msra.mxu0 %v314
    %344 = vmatpush.msra.mxu0 %v313
    %345 = vmatpush.msra.mxu0 %v312
    %346 = vmatpush.msra.mxu0 %v311
    %347 = vmatmul.f32.gmra.mxu0 %v310
    %v348 = vpop.f32.mrf.mxu0
    %v349 = vadd.f32 %v329, %v348
    %350 = vdwg.mxu0
    %v351 = vmax.f32 %v349, 0.0
    %v352 = vld [vmem:[#allocation15] sm:$0xff]
    %v353 = vld [vmem:[#allocation15 + $0x8] sm:$0xff]
    %v354 = vld [vmem:[#allocation15 + $0x10] sm:$0xff]
    %v355 = vld [vmem:[#allocation15 + $0x18] sm:$0xff]
    %v356 = vld [vmem:[#allocation15 + $0x20] sm:$0xff]
    %v357 = vld [vmem:[#allocation15 + $0x28] sm:$0xff]
    %v358 = vld [vmem:[#allocation15 + $0x30] sm:$0xff]
    %v359 = vld [vmem:[#allocation15 + $0x38] sm:$0xff]
    %v360 = vld [vmem:[#allocation15 + $0x40] sm:$0xff]
    %v361 = vld [vmem:[#allocation15 + $0x48] sm:$0xff]
    %v362 = vld [vmem:[#allocation15 + $0x50] sm:$0xff]
    %v363 = vld [vmem:[#allocation15 + $0x58] sm:$0xff]
    %v364 = vld [vmem:[#allocation15 + $0x60] sm:$0xff]
    %v365 = vld [vmem:[#allocation15 + $0x68] sm:$0xff]
    %v366 = vld [vmem:[#allocation15 + $0x70] sm:$0xff]
    %v367 = vld [vmem:[#allocation15 + $0x78] sm:$0xff]
    %v368 = vld [vmem:[#allocation15 + $0x80] sm:$0xff]
    %v369 = vld [vmem:[#allocation15 + $0x88] sm:$0xff]
    %v370 = vld [vmem:[#allocation15 + $0x90] sm:$0xff]
    %v371 = vld [vmem:[#allocation15 + $0x98] sm:$0xff]
    %v372 = vld [vmem:[#allocation15 + $0xa0] sm:$0xff]
    %v373 = vld [vmem:[#allocation15 + $0xa8] sm:$0xff]
    %v374 = vld [vmem:[#allocation15 + $0xb0] sm:$0xff]
    %v375 = vld [vmem:[#allocation15 + $0xb8] sm:$0xff]
    %v376 = vld [vmem:[#allocation15 + $0xc0] sm:$0xff]
    %v377 = vld [vmem:[#allocation15 + $0xc8] sm:$0xff]
    %v378 = vld [vmem:[#allocation15 + $0xd0] sm:$0xff]
    %v379 = vld [vmem:[#allocation15 + $0xd8] sm:$0xff]
    %v380 = vld [vmem:[#allocation15 + $0xe0] sm:$0xff]
    %v381 = vld [vmem:[#allocation15 + $0xe8] sm:$0xff]
    %v382 = vld [vmem:[#allocation15 + $0xf0] sm:$0xff]
    %v383 = vld [vmem:[#allocation15 + $0xf8] sm:$0xff]
    %v384 = vld [vmem:[#allocation15 + $0x100] sm:$0xff]
    %v385 = vld [vmem:[#allocation15 + $0x108] sm:$0xff]
    %v386 = vld [vmem:[#allocation15 + $0x110] sm:$0xff]
    %v387 = vld [vmem:[#allocation15 + $0x118] sm:$0xff]
    %v388 = vld [vmem:[#allocation15 + $0x120] sm:$0xff]
    %v389 = vld [vmem:[#allocation15 + $0x128] sm:$0xff]
    %v390 = vld [vmem:[#allocation15 + $0x130] sm:$0xff]
    %v391 = vld [vmem:[#allocation15 + $0x138] sm:$0xff]
    %v392 = vld [vmem:[#allocation15 + $0x140] sm:$0xff]
    %v393 = vld [vmem:[#allocation15 + $0x148] sm:$0xff]
    %v394 = vld [vmem:[#allocation15 + $0x150] sm:$0xff]
    %v395 = vld [vmem:[#allocation15 + $0x158] sm:$0xff]
    %v396 = vld [vmem:[#allocation15 + $0x160] sm:$0xff]
    %v397 = vld [vmem:[#allocation15 + $0x168] sm:$0xff]
    %v398 = vld [vmem:[#allocation15 + $0x170] sm:$0xff]
    %v399 = vld [vmem:[#allocation15 + $0x178] sm:$0xff]
    %v400 = vld [vmem:[#allocation15 + $0x180] sm:$0xff]
    %v401 = vld [vmem:[#allocation15 + $0x188] sm:$0xff]
    %v402 = vld [vmem:[#allocation15 + $0x190] sm:$0xff]
    %v403 = vld [vmem:[#allocation15 + $0x198] sm:$0xff]
    %v404 = vld [vmem:[#allocation15 + $0x1a0] sm:$0xff]
    %v405 = vld [vmem:[#allocation15 + $0x1a8] sm:$0xff]
    %v406 = vld [vmem:[#allocation15 + $0x1b0] sm:$0xff]
    %v407 = vld [vmem:[#allocation15 + $0x1b8] sm:$0xff]
    %v408 = vld [vmem:[#allocation15 + $0x1c0] sm:$0xff]
    %v409 = vld [vmem:[#allocation15 + $0x1c8] sm:$0xff]
    %v410 = vld [vmem:[#allocation15 + $0x1d0] sm:$0xff]
    %v411 = vld [vmem:[#allocation15 + $0x1d8] sm:$0xff]
    %v412 = vld [vmem:[#allocation15 + $0x1e0] sm:$0xff]
    %v413 = vld [vmem:[#allocation15 + $0x1e8] sm:$0xff]
    %v414 = vld [vmem:[#allocation15 + $0x1f0] sm:$0xff]
    %v415 = vld [vmem:[#allocation15 + $0x1f8] sm:$0xff]
    %v416 = vld [vmem:[#allocation15 + $0x200] sm:$0xff]
    %v417 = vld [vmem:[#allocation15 + $0x208] sm:$0xff]
    %v418 = vld [vmem:[#allocation15 + $0x210] sm:$0xff]
    %v419 = vld [vmem:[#allocation15 + $0x218] sm:$0xff]
    %v420 = vld [vmem:[#allocation15 + $0x220] sm:$0xff]
    %v421 = vld [vmem:[#allocation15 + $0x228] sm:$0xff]
    %v422 = vld [vmem:[#allocation15 + $0x230] sm:$0xff]
    %v423 = vld [vmem:[#allocation15 + $0x238] sm:$0xff]
    %v424 = vld [vmem:[#allocation15 + $0x240] sm:$0xff]
    %v425 = vld [vmem:[#allocation15 + $0x248] sm:$0xff]
    %v426 = vld [vmem:[#allocation15 + $0x250] sm:$0xff]
    %v427 = vld [vmem:[#allocation15 + $0x258] sm:$0xff]
    %v428 = vld [vmem:[#allocation15 + $0x260] sm:$0xff]
    %v429 = vld [vmem:[#allocation15 + $0x268] sm:$0xff]
    %v430 = vld [vmem:[#allocation15 + $0x270] sm:$0xff]
    %v431 = vld [vmem:[#allocation15 + $0x278] sm:$0xff]
    %v432 = vld [vmem:[#allocation15 + $0x280] sm:$0xff]
    %v433 = vld [vmem:[#allocation15 + $0x288] sm:$0xff]
    %v434 = vld [vmem:[#allocation15 + $0x290] sm:$0xff]
    %v435 = vld [vmem:[#allocation15 + $0x298] sm:$0xff]
    %v436 = vld [vmem:[#allocation15 + $0x2a0] sm:$0xff]
    %v437 = vld [vmem:[#allocation15 + $0x2a8] sm:$0xff]
    %v438 = vld [vmem:[#allocation15 + $0x2b0] sm:$0xff]
    %v439 = vld [vmem:[#allocation15 + $0x2b8] sm:$0xff]
    %v440 = vld [vmem:[#allocation15 + $0x2c0] sm:$0xff]
    %v441 = vld [vmem:[#allocation15 + $0x2c8] sm:$0xff]
    %v442 = vld [vmem:[#allocation15 + $0x2d0] sm:$0xff]
    %v443 = vld [vmem:[#allocation15 + $0x2d8] sm:$0xff]
    %v444 = vld [vmem:[#allocation15 + $0x2e0] sm:$0xff]
    %v445 = vld [vmem:[#allocation15 + $0x2e8] sm:$0xff]
    %v446 = vld [vmem:[#allocation15 + $0x2f0] sm:$0xff]
    %v447 = vld [vmem:[#allocation15 + $0x2f8] sm:$0xff]
    %v448 = vld [vmem:[#allocation15 + $0x300] sm:$0xff]
    %v449 = vld [vmem:[#allocation15 + $0x308] sm:$0xff]
    %v450 = vld [vmem:[#allocation15 + $0x310] sm:$0xff]
    %v451 = vld [vmem:[#allocation15 + $0x318] sm:$0xff]
    %v452 = vld [vmem:[#allocation15 + $0x320] sm:$0xff]
    %v453 = vld [vmem:[#allocation15 + $0x328] sm:$0xff]
    %v454 = vld [vmem:[#allocation15 + $0x330] sm:$0xff]
    %v455 = vld [vmem:[#allocation15 + $0x338] sm:$0xff]
    %v456 = vld [vmem:[#allocation15 + $0x340] sm:$0xff]
    %v457 = vld [vmem:[#allocation15 + $0x348] sm:$0xff]
    %v458 = vld [vmem:[#allocation15 + $0x350] sm:$0xff]
    %v459 = vld [vmem:[#allocation15 + $0x358] sm:$0xff]
    %v460 = vld [vmem:[#allocation15 + $0x360] sm:$0xff]
    %v461 = vld [vmem:[#allocation15 + $0x368] sm:$0xff]
    %v462 = vld [vmem:[#allocation15 + $0x370] sm:$0xff]
    %v463 = vld [vmem:[#allocation15 + $0x378] sm:$0xff]
    %v464 = vld [vmem:[#allocation15 + $0x380] sm:$0xff]
    %v465 = vld [vmem:[#allocation15 + $0x388] sm:$0xff]
    %v466 = vld [vmem:[#allocation15 + $0x390] sm:$0xff]
    %v467 = vld [vmem:[#allocation15 + $0x398] sm:$0xff]
    %v468 = vld [vmem:[#allocation15 + $0x3a0] sm:$0xff]
    %v469 = vld [vmem:[#allocation15 + $0x3a8] sm:$0xff]
    %v470 = vld [vmem:[#allocation15 + $0x3b0] sm:$0xff]
    %v471 = vld [vmem:[#allocation15 + $0x3b8] sm:$0xff]
    %v472 = vld [vmem:[#allocation15 + $0x3c0] sm:$0xff]
    %v473 = vld [vmem:[#allocation15 + $0x3c8] sm:$0xff]
    %v474 = vld [vmem:[#allocation15 + $0x3d0] sm:$0xff]
    %v475 = vld [vmem:[#allocation15 + $0x3d8] sm:$0xff]
    %v476 = vld [vmem:[#allocation15 + $0x3e0] sm:$0xff]
    %v477 = vld [vmem:[#allocation15 + $0x3e8] sm:$0xff]
    %v478 = vld [vmem:[#allocation15 + $0x3f0] sm:$0xff]
    %v479 = vld [vmem:[#allocation15 + $0x3f8] sm:$0xff]
    %v480 = vld [vmem:[%s10] sm:$0xff]
    %v482 = vperm.slane %v480, 0
    %v483 = vperm.slane %v480, 1
    %v484 = vperm.slane %v480, 2
    %v485 = vperm.slane %v480, 3
    %v486 = vperm.slane %v480, 4
    %v487 = vperm.slane %v480, 5
    %v488 = vperm.slane %v480, 6
    %v489 = vperm.slane %v480, 7
    %498 = vmatpush.msra.mxu0 %v472
    %499 = vmatpush.msra.mxu0 %v464
    %500 = vmatpush.msra.mxu0 %v456
    %501 = vmatpush.msra.mxu0 %v448
    %502 = vmatpush.msra.mxu0 %v440
    %503 = vmatpush.msra.mxu0 %v432
    %504 = vmatpush.msra.mxu0 %v424
    %505 = vmatpush.msra.mxu0 %v416
    %506 = vmatpush.msra.mxu0 %v408
    %507 = vmatpush.msra.mxu0 %v400
    %508 = vmatpush.msra.mxu0 %v392
    %509 = vmatpush.msra.mxu0 %v384
    %510 = vmatpush.msra.mxu0 %v376
    %511 = vmatpush.msra.mxu0 %v368
    %512 = vmatpush.msra.mxu0 %v360
    %513 = vmatpush.msra.mxu0 %v352
    %514 = vmatmul.f32.gmra.mxu0 %v351
    %v515 = vpop.f32.mrf.mxu0
    %v516 = vadd.f32 %v482, %v515
    %517 = vdwg.mxu0
    %518 = vmatpush.msra.mxu0 %v473
    %519 = vmatpush.msra.mxu0 %v465
    %520 = vmatpush.msra.mxu0 %v457
    %521 = vmatpush.msra.mxu0 %v449
    %522 = vmatpush.msra.mxu0 %v441
    %523 = vmatpush.msra.mxu0 %v433
    %524 = vmatpush.msra.mxu0 %v425
    %525 = vmatpush.msra.mxu0 %v417
    %526 = vmatpush.msra.mxu0 %v409
    %527 = vmatpush.msra.mxu0 %v401
    %528 = vmatpush.msra.mxu0 %v393
    %529 = vmatpush.msra.mxu0 %v385
    %530 = vmatpush.msra.mxu0 %v377
    %531 = vmatpush.msra.mxu0 %v369
    %532 = vmatpush.msra.mxu0 %v361
    %533 = vmatpush.msra.mxu0 %v353
    %534 = vmatmul.f32.gmra.mxu0 %v351
    %v535 = vpop.f32.mrf.mxu0
    %v536 = vadd.f32 %v483, %v535
    %537 = vdwg.mxu0
    %538 = vmatpush.msra.mxu0 %v474
    %539 = vmatpush.msra.mxu0 %v466
    %540 = vmatpush.msra.mxu0 %v458
    %541 = vmatpush.msra.mxu0 %v450
    %542 = vmatpush.msra.mxu0 %v442
    %543 = vmatpush.msra.mxu0 %v434
    %544 = vmatpush.msra.mxu0 %v426
    %545 = vmatpush.msra.mxu0 %v418
    %546 = vmatpush.msra.mxu0 %v410
    %547 = vmatpush.msra.mxu0 %v402
    %548 = vmatpush.msra.mxu0 %v394
    %549 = vmatpush.msra.mxu0 %v386
    %550 = vmatpush.msra.mxu0 %v378
    %551 = vmatpush.msra.mxu0 %v370
    %552 = vmatpush.msra.mxu0 %v362
    %553 = vmatpush.msra.mxu0 %v354
    %554 = vmatmul.f32.gmra.mxu0 %v351
    %v555 = vpop.f32.mrf.mxu0
    %v556 = vadd.f32 %v484, %v555
    %557 = vdwg.mxu0
    %558 = vmatpush.msra.mxu0 %v475
    %559 = vmatpush.msra.mxu0 %v467
    %560 = vmatpush.msra.mxu0 %v459
    %561 = vmatpush.msra.mxu0 %v451
    %562 = vmatpush.msra.mxu0 %v443
    %563 = vmatpush.msra.mxu0 %v435
    %564 = vmatpush.msra.mxu0 %v427
    %565 = vmatpush.msra.mxu0 %v419
    %566 = vmatpush.msra.mxu0 %v411
    %567 = vmatpush.msra.mxu0 %v403
    %568 = vmatpush.msra.mxu0 %v395
    %569 = vmatpush.msra.mxu0 %v387
    %570 = vmatpush.msra.mxu0 %v379
    %571 = vmatpush.msra.mxu0 %v371
    %572 = vmatpush.msra.mxu0 %v363
    %573 = vmatpush.msra.mxu0 %v355
    %574 = vmatmul.f32.gmra.mxu0 %v351
    %v575 = vpop.f32.mrf.mxu0
    %v576 = vadd.f32 %v485, %v575
    %577 = vdwg.mxu0
    %578 = vmatpush.msra.mxu0 %v476
    %579 = vmatpush.msra.mxu0 %v468
    %580 = vmatpush.msra.mxu0 %v460
    %581 = vmatpush.msra.mxu0 %v452
    %582 = vmatpush.msra.mxu0 %v444
    %583 = vmatpush.msra.mxu0 %v436
    %584 = vmatpush.msra.mxu0 %v428
    %585 = vmatpush.msra.mxu0 %v420
    %586 = vmatpush.msra.mxu0 %v412
    %587 = vmatpush.msra.mxu0 %v404
    %588 = vmatpush.msra.mxu0 %v396
    %589 = vmatpush.msra.mxu0 %v388
    %590 = vmatpush.msra.mxu0 %v380
    %591 = vmatpush.msra.mxu0 %v372
    %592 = vmatpush.msra.mxu0 %v364
    %593 = vmatpush.msra.mxu0 %v356
    %594 = vmatmul.f32.gmra.mxu0 %v351
    %v595 = vpop.f32.mrf.mxu0
    %v596 = vadd.f32 %v486, %v595
    %597 = vdwg.mxu0
    %598 = vmatpush.msra.mxu0 %v477
    %599 = vmatpush.msra.mxu0 %v469
    %600 = vmatpush.msra.mxu0 %v461
    %601 = vmatpush.msra.mxu0 %v453
    %602 = vmatpush.msra.mxu0 %v445
    %603 = vmatpush.msra.mxu0 %v437
    %604 = vmatpush.msra.mxu0 %v429
    %605 = vmatpush.msra.mxu0 %v421
    %606 = vmatpush.msra.mxu0 %v413
    %607 = vmatpush.msra.mxu0 %v405
    %608 = vmatpush.msra.mxu0 %v397
    %609 = vmatpush.msra.mxu0 %v389
    %610 = vmatpush.msra.mxu0 %v381
    %611 = vmatpush.msra.mxu0 %v373
    %612 = vmatpush.msra.mxu0 %v365
    %613 = vmatpush.msra.mxu0 %v357
    %614 = vmatmul.f32.gmra.mxu0 %v351
    %v615 = vpop.f32.mrf.mxu0
    %v616 = vadd.f32 %v487, %v615
    %617 = vdwg.mxu0
    %618 = vmatpush.msra.mxu0 %v478
    %619 = vmatpush.msra.mxu0 %v470
    %620 = vmatpush.msra.mxu0 %v462
    %621 = vmatpush.msra.mxu0 %v454
    %622 = vmatpush.msra.mxu0 %v446
    %623 = vmatpush.msra.mxu0 %v438
    %624 = vmatpush.msra.mxu0 %v430
    %625 = vmatpush.msra.mxu0 %v422
    %626 = vmatpush.msra.mxu0 %v414
    %627 = vmatpush.msra.mxu0 %v406
    %628 = vmatpush.msra.mxu0 %v398
    %629 = vmatpush.msra.mxu0 %v390
    %630 = vmatpush.msra.mxu0 %v382
    %631 = vmatpush.msra.mxu0 %v374
    %632 = vmatpush.msra.mxu0 %v366
    %633 = vmatpush.msra.mxu0 %v358
    %634 = vmatmul.f32.gmra.mxu0 %v351
    %v635 = vpop.f32.mrf.mxu0
    %v636 = vadd.f32 %v488, %v635
    %637 = vdwg.mxu0
    %638 = vmatpush.msra.mxu0 %v479
    %639 = vmatpush.msra.mxu0 %v471
    %640 = vmatpush.msra.mxu0 %v463
    %641 = vmatpush.msra.mxu0 %v455
    %642 = vmatpush.msra.mxu0 %v447
    %643 = vmatpush.msra.mxu0 %v439
    %644 = vmatpush.msra.mxu0 %v431
    %645 = vmatpush.msra.mxu0 %v423
    %646 = vmatpush.msra.mxu0 %v415
    %647 = vmatpush.msra.mxu0 %v407
    %648 = vmatpush.msra.mxu0 %v399
    %649 = vmatpush.msra.mxu0 %v391
    %650 = vmatpush.msra.mxu0 %v383
    %651 = vmatpush.msra.mxu0 %v375
    %652 = vmatpush.msra.mxu0 %v367
    %653 = vmatpush.msra.mxu0 %v359
    %654 = vmatmul.f32.gmra.mxu0 %v351
    %v655 = vpop.f32.mrf.mxu0
    %v656 = vadd.f32 %v489, %v655
    %657 = vdwg.mxu0
    %v658 = vmax.f32 %v516, 0.0
    %v659 = vmax.f32 %v536, 0.0
    %v660 = vmax.f32 %v556, 0.0
    %v661 = vmax.f32 %v576, 0.0
    %v662 = vmax.f32 %v596, 0.0
    %v663 = vmax.f32 %v616, 0.0
    %v664 = vmax.f32 %v636, 0.0
    %v665 = vmax.f32 %v656, 0.0
    %v666 = vld [vmem:[#allocation16] sm:$0xff]
    %v667 = vld [vmem:[#allocation16 + $0x8] sm:$0xff]
    %v668 = vld [vmem:[#allocation16 + $0x10] sm:$0xff]
    %v669 = vld [vmem:[#allocation16 + $0x18] sm:$0xff]
    %v670 = vld [vmem:[#allocation16 + $0x20] sm:$0xff]
    %v671 = vld [vmem:[#allocation16 + $0x28] sm:$0xff]
    %v672 = vld [vmem:[#allocation16 + $0x30] sm:$0xff]
    %v673 = vld [vmem:[#allocation16 + $0x38] sm:$0xff]
    %v674 = vld [vmem:[#allocation16 + $0x40] sm:$0xff]
    %v675 = vld [vmem:[#allocation16 + $0x48] sm:$0xff]
    %v676 = vld [vmem:[#allocation16 + $0x50] sm:$0xff]
    %v677 = vld [vmem:[#allocation16 + $0x58] sm:$0xff]
    %v678 = vld [vmem:[#allocation16 + $0x60] sm:$0xff]
    %v679 = vld [vmem:[#allocation16 + $0x68] sm:$0xff]
    %v680 = vld [vmem:[#allocation16 + $0x70] sm:$0xff]
    %v681 = vld [vmem:[#allocation16 + $0x78] sm:$0xff]
    %v682 = vld [vmem:[#allocation16 + $0x80] sm:$0xff]
    %v683 = vld [vmem:[#allocation16 + $0x88] sm:$0xff]
    %v684 = vld [vmem:[#allocation16 + $0x90] sm:$0xff]
    %v685 = vld [vmem:[#allocation16 + $0x98] sm:$0xff]
    %v686 = vld [vmem:[#allocation16 + $0xa0] sm:$0xff]
    %v687 = vld [vmem:[#allocation16 + $0xa8] sm:$0xff]
    %v688 = vld [vmem:[#allocation16 + $0xb0] sm:$0xff]
    %v689 = vld [vmem:[#allocation16 + $0xb8] sm:$0xff]
    %v690 = vld [vmem:[#allocation16 + $0xc0] sm:$0xff]
    %v691 = vld [vmem:[#allocation16 + $0xc8] sm:$0xff]
    %v692 = vld [vmem:[#allocation16 + $0xd0] sm:$0xff]
    %v693 = vld [vmem:[#allocation16 + $0xd8] sm:$0xff]
    %v694 = vld [vmem:[#allocation16 + $0xe0] sm:$0xff]
    %v695 = vld [vmem:[#allocation16 + $0xe8] sm:$0xff]
    %v696 = vld [vmem:[#allocation16 + $0xf0] sm:$0xff]
    %v697 = vld [vmem:[#allocation16 + $0xf8] sm:$0xff]
    %v698 = vld [vmem:[#allocation16 + $0x100] sm:$0xff]
    %v699 = vld [vmem:[#allocation16 + $0x108] sm:$0xff]
    %v700 = vld [vmem:[#allocation16 + $0x110] sm:$0xff]
    %v701 = vld [vmem:[#allocation16 + $0x118] sm:$0xff]
    %v702 = vld [vmem:[#allocation16 + $0x120] sm:$0xff]
    %v703 = vld [vmem:[#allocation16 + $0x128] sm:$0xff]
    %v704 = vld [vmem:[#allocation16 + $0x130] sm:$0xff]
    %v705 = vld [vmem:[#allocation16 + $0x138] sm:$0xff]
    %v706 = vld [vmem:[#allocation16 + $0x140] sm:$0xff]
    %v707 = vld [vmem:[#allocation16 + $0x148] sm:$0xff]
    %v708 = vld [vmem:[#allocation16 + $0x150] sm:$0xff]
    %v709 = vld [vmem:[#allocation16 + $0x158] sm:$0xff]
    %v710 = vld [vmem:[#allocation16 + $0x160] sm:$0xff]
    %v711 = vld [vmem:[#allocation16 + $0x168] sm:$0xff]
    %v712 = vld [vmem:[#allocation16 + $0x170] sm:$0xff]
    %v713 = vld [vmem:[#allocation16 + $0x178] sm:$0xff]
    %v714 = vld [vmem:[#allocation16 + $0x180] sm:$0xff]
    %v715 = vld [vmem:[#allocation16 + $0x188] sm:$0xff]
    %v716 = vld [vmem:[#allocation16 + $0x190] sm:$0xff]
    %v717 = vld [vmem:[#allocation16 + $0x198] sm:$0xff]
    %v718 = vld [vmem:[#allocation16 + $0x1a0] sm:$0xff]
    %v719 = vld [vmem:[#allocation16 + $0x1a8] sm:$0xff]
    %v720 = vld [vmem:[#allocation16 + $0x1b0] sm:$0xff]
    %v721 = vld [vmem:[#allocation16 + $0x1b8] sm:$0xff]
    %v722 = vld [vmem:[#allocation16 + $0x1c0] sm:$0xff]
    %v723 = vld [vmem:[#allocation16 + $0x1c8] sm:$0xff]
    %v724 = vld [vmem:[#allocation16 + $0x1d0] sm:$0xff]
    %v725 = vld [vmem:[#allocation16 + $0x1d8] sm:$0xff]
    %v726 = vld [vmem:[#allocation16 + $0x1e0] sm:$0xff]
    %v727 = vld [vmem:[#allocation16 + $0x1e8] sm:$0xff]
    %v728 = vld [vmem:[#allocation16 + $0x1f0] sm:$0xff]
    %v729 = vld [vmem:[#allocation16 + $0x1f8] sm:$0xff]
    %v730 = vld [vmem:[#allocation16 + $0x200] sm:$0xff]
    %v731 = vld [vmem:[#allocation16 + $0x208] sm:$0xff]
    %v732 = vld [vmem:[#allocation16 + $0x210] sm:$0xff]
    %v733 = vld [vmem:[#allocation16 + $0x218] sm:$0xff]
    %v734 = vld [vmem:[#allocation16 + $0x220] sm:$0xff]
    %v735 = vld [vmem:[#allocation16 + $0x228] sm:$0xff]
    %v736 = vld [vmem:[#allocation16 + $0x230] sm:$0xff]
    %v737 = vld [vmem:[#allocation16 + $0x238] sm:$0xff]
    %v738 = vld [vmem:[#allocation16 + $0x240] sm:$0xff]
    %v739 = vld [vmem:[#allocation16 + $0x248] sm:$0xff]
    %v740 = vld [vmem:[#allocation16 + $0x250] sm:$0xff]
    %v741 = vld [vmem:[#allocation16 + $0x258] sm:$0xff]
    %v742 = vld [vmem:[#allocation16 + $0x260] sm:$0xff]
    %v743 = vld [vmem:[#allocation16 + $0x268] sm:$0xff]
    %v744 = vld [vmem:[#allocation16 + $0x270] sm:$0xff]
    %v745 = vld [vmem:[#allocation16 + $0x278] sm:$0xff]
    %v746 = vld [vmem:[#allocation16 + $0x280] sm:$0xff]
    %v747 = vld [vmem:[#allocation16 + $0x288] sm:$0xff]
    %v748 = vld [vmem:[#allocation16 + $0x290] sm:$0xff]
    %v749 = vld [vmem:[#allocation16 + $0x298] sm:$0xff]
    %v750 = vld [vmem:[#allocation16 + $0x2a0] sm:$0xff]
    %v751 = vld [vmem:[#allocation16 + $0x2a8] sm:$0xff]
    %v752 = vld [vmem:[#allocation16 + $0x2b0] sm:$0xff]
    %v753 = vld [vmem:[#allocation16 + $0x2b8] sm:$0xff]
    %v754 = vld [vmem:[#allocation16 + $0x2c0] sm:$0xff]
    %v755 = vld [vmem:[#allocation16 + $0x2c8] sm:$0xff]
    %v756 = vld [vmem:[#allocation16 + $0x2d0] sm:$0xff]
    %v757 = vld [vmem:[#allocation16 + $0x2d8] sm:$0xff]
    %v758 = vld [vmem:[#allocation16 + $0x2e0] sm:$0xff]
    %v759 = vld [vmem:[#allocation16 + $0x2e8] sm:$0xff]
    %v760 = vld [vmem:[#allocation16 + $0x2f0] sm:$0xff]
    %v761 = vld [vmem:[#allocation16 + $0x2f8] sm:$0xff]
    %v762 = vld [vmem:[#allocation16 + $0x300] sm:$0xff]
    %v763 = vld [vmem:[#allocation16 + $0x308] sm:$0xff]
    %v764 = vld [vmem:[#allocation16 + $0x310] sm:$0xff]
    %v765 = vld [vmem:[#allocation16 + $0x318] sm:$0xff]
    %v766 = vld [vmem:[#allocation16 + $0x320] sm:$0xff]
    %v767 = vld [vmem:[#allocation16 + $0x328] sm:$0xff]
    %v768 = vld [vmem:[#allocation16 + $0x330] sm:$0xff]
    %v769 = vld [vmem:[#allocation16 + $0x338] sm:$0xff]
    %v770 = vld [vmem:[#allocation16 + $0x340] sm:$0xff]
    %v771 = vld [vmem:[#allocation16 + $0x348] sm:$0xff]
    %v772 = vld [vmem:[#allocation16 + $0x350] sm:$0xff]
    %v773 = vld [vmem:[#allocation16 + $0x358] sm:$0xff]
    %v774 = vld [vmem:[#allocation16 + $0x360] sm:$0xff]
    %v775 = vld [vmem:[#allocation16 + $0x368] sm:$0xff]
    %v776 = vld [vmem:[#allocation16 + $0x370] sm:$0xff]
    %v777 = vld [vmem:[#allocation16 + $0x378] sm:$0xff]
    %v778 = vld [vmem:[#allocation16 + $0x380] sm:$0xff]
    %v779 = vld [vmem:[#allocation16 + $0x388] sm:$0xff]
    %v780 = vld [vmem:[#allocation16 + $0x390] sm:$0xff]
    %v781 = vld [vmem:[#allocation16 + $0x398] sm:$0xff]
    %v782 = vld [vmem:[#allocation16 + $0x3a0] sm:$0xff]
    %v783 = vld [vmem:[#allocation16 + $0x3a8] sm:$0xff]
    %v784 = vld [vmem:[#allocation16 + $0x3b0] sm:$0xff]
    %v785 = vld [vmem:[#allocation16 + $0x3b8] sm:$0xff]
    %v786 = vld [vmem:[#allocation16 + $0x3c0] sm:$0xff]
    %v787 = vld [vmem:[#allocation16 + $0x3c8] sm:$0xff]
    %v788 = vld [vmem:[#allocation16 + $0x3d0] sm:$0xff]
    %v789 = vld [vmem:[#allocation16 + $0x3d8] sm:$0xff]
    %v790 = vld [vmem:[#allocation16 + $0x3e0] sm:$0xff]
    %v791 = vld [vmem:[#allocation16 + $0x3e8] sm:$0xff]
    %v792 = vld [vmem:[#allocation16 + $0x3f0] sm:$0xff]
    %v793 = vld [vmem:[#allocation16 + $0x3f8] sm:$0xff]
    %v794 = vld [vmem:[%s12] sm:$0x1]
    %v796 = vperm.slane %v794, 0
    %798 = vmatpush.msra.mxu0 %v681
    %799 = vmatpush.msra.mxu0 %v680
    %800 = vmatpush.msra.mxu0 %v679
    %801 = vmatpush.msra.mxu0 %v678
    %802 = vmatpush.msra.mxu0 %v677
    %803 = vmatpush.msra.mxu0 %v676
    %804 = vmatpush.msra.mxu0 %v675
    %805 = vmatpush.msra.mxu0 %v674
    %806 = vmatpush.msra.mxu0 %v673
    %807 = vmatpush.msra.mxu0 %v672
    %808 = vmatpush.msra.mxu0 %v671
    %809 = vmatpush.msra.mxu0 %v670
    %810 = vmatpush.msra.mxu0 %v669
    %811 = vmatpush.msra.mxu0 %v668
    %812 = vmatpush.msra.mxu0 %v667
    %813 = vmatpush.msra.mxu0 %v666
    %814 = vmatmul.f32.gmra.mxu0 %v658
    %v815 = vpop.f32.mrf.mxu0
    %v816 = vadd.f32 %v796, %v815
    %817 = vdwg.mxu0
    %818 = vmatpush.msra.mxu0 %v697
    %819 = vmatpush.msra.mxu0 %v696
    %820 = vmatpush.msra.mxu0 %v695
    %821 = vmatpush.msra.mxu0 %v694
    %822 = vmatpush.msra.mxu0 %v693
    %823 = vmatpush.msra.mxu0 %v692
    %824 = vmatpush.msra.mxu0 %v691
    %825 = vmatpush.msra.mxu0 %v690
    %826 = vmatpush.msra.mxu0 %v689
    %827 = vmatpush.msra.mxu0 %v688
    %828 = vmatpush.msra.mxu0 %v687
    %829 = vmatpush.msra.mxu0 %v686
    %830 = vmatpush.msra.mxu0 %v685
    %831 = vmatpush.msra.mxu0 %v684
    %832 = vmatpush.msra.mxu0 %v683
    %833 = vmatpush.msra.mxu0 %v682
    %834 = vmatmul.f32.gmra.mxu0 %v659
    %v835 = vpop.f32.mrf.mxu0
    %v836 = vadd.f32 %v816, %v835
    %837 = vdwg.mxu0
    %838 = vmatpush.msra.mxu0 %v713
    %839 = vmatpush.msra.mxu0 %v712
    %840 = vmatpush.msra.mxu0 %v711
    %841 = vmatpush.msra.mxu0 %v710
    %842 = vmatpush.msra.mxu0 %v709
    %843 = vmatpush.msra.mxu0 %v708
    %844 = vmatpush.msra.mxu0 %v707
    %845 = vmatpush.msra.mxu0 %v706
    %846 = vmatpush.msra.mxu0 %v705
    %847 = vmatpush.msra.mxu0 %v704
    %848 = vmatpush.msra.mxu0 %v703
    %849 = vmatpush.msra.mxu0 %v702
    %850 = vmatpush.msra.mxu0 %v701
    %851 = vmatpush.msra.mxu0 %v700
    %852 = vmatpush.msra.mxu0 %v699
    %853 = vmatpush.msra.mxu0 %v698
    %854 = vmatmul.f32.gmra.mxu0 %v660
    %v855 = vpop.f32.mrf.mxu0
    %v856 = vadd.f32 %v836, %v855
    %857 = vdwg.mxu0
    %858 = vmatpush.msra.mxu0 %v729
    %859 = vmatpush.msra.mxu0 %v728
    %860 = vmatpush.msra.mxu0 %v727
    %861 = vmatpush.msra.mxu0 %v726
    %862 = vmatpush.msra.mxu0 %v725
    %863 = vmatpush.msra.mxu0 %v724
    %864 = vmatpush.msra.mxu0 %v723
    %865 = vmatpush.msra.mxu0 %v722
    %866 = vmatpush.msra.mxu0 %v721
    %867 = vmatpush.msra.mxu0 %v720
    %868 = vmatpush.msra.mxu0 %v719
    %869 = vmatpush.msra.mxu0 %v718
    %870 = vmatpush.msra.mxu0 %v717
    %871 = vmatpush.msra.mxu0 %v716
    %872 = vmatpush.msra.mxu0 %v715
    %873 = vmatpush.msra.mxu0 %v714
    %874 = vmatmul.f32.gmra.mxu0 %v661
    %v875 = vpop.f32.mrf.mxu0
    %v876 = vadd.f32 %v856, %v875
    %877 = vdwg.mxu0
    %878 = vmatpush.msra.mxu0 %v745
    %879 = vmatpush.msra.mxu0 %v744
    %880 = vmatpush.msra.mxu0 %v743
    %881 = vmatpush.msra.mxu0 %v742
    %882 = vmatpush.msra.mxu0 %v741
    %883 = vmatpush.msra.mxu0 %v740
    %884 = vmatpush.msra.mxu0 %v739
    %885 = vmatpush.msra.mxu0 %v738
    %886 = vmatpush.msra.mxu0 %v737
    %887 = vmatpush.msra.mxu0 %v736
    %888 = vmatpush.msra.mxu0 %v735
    %889 = vmatpush.msra.mxu0 %v734
    %890 = vmatpush.msra.mxu0 %v733
    %891 = vmatpush.msra.mxu0 %v732
    %892 = vmatpush.msra.mxu0 %v731
    %893 = vmatpush.msra.mxu0 %v730
    %894 = vmatmul.f32.gmra.mxu0 %v662
    %v895 = vpop.f32.mrf.mxu0
    %v896 = vadd.f32 %v876, %v895
    %897 = vdwg.mxu0
    %898 = vmatpush.msra.mxu0 %v761
    %899 = vmatpush.msra.mxu0 %v760
    %900 = vmatpush.msra.mxu0 %v759
    %901 = vmatpush.msra.mxu0 %v758
    %902 = vmatpush.msra.mxu0 %v757
    %903 = vmatpush.msra.mxu0 %v756
    %904 = vmatpush.msra.mxu0 %v755
    %905 = vmatpush.msra.mxu0 %v754
    %906 = vmatpush.msra.mxu0 %v753
    %907 = vmatpush.msra.mxu0 %v752
    %908 = vmatpush.msra.mxu0 %v751
    %909 = vmatpush.msra.mxu0 %v750
    %910 = vmatpush.msra.mxu0 %v749
    %911 = vmatpush.msra.mxu0 %v748
    %912 = vmatpush.msra.mxu0 %v747
    %913 = vmatpush.msra.mxu0 %v746
    %914 = vmatmul.f32.gmra.mxu0 %v663
    %v915 = vpop.f32.mrf.mxu0
    %v916 = vadd.f32 %v896, %v915
    %917 = vdwg.mxu0
    %918 = vmatpush.msra.mxu0 %v777
    %919 = vmatpush.msra.mxu0 %v776
    %920 = vmatpush.msra.mxu0 %v775
    %921 = vmatpush.msra.mxu0 %v774
    %922 = vmatpush.msra.mxu0 %v773
    %923 = vmatpush.msra.mxu0 %v772
    %924 = vmatpush.msra.mxu0 %v771
    %925 = vmatpush.msra.mxu0 %v770
    %926 = vmatpush.msra.mxu0 %v769
    %927 = vmatpush.msra.mxu0 %v768
    %928 = vmatpush.msra.mxu0 %v767
    %929 = vmatpush.msra.mxu0 %v766
    %930 = vmatpush.msra.mxu0 %v765
    %931 = vmatpush.msra.mxu0 %v764
    %932 = vmatpush.msra.mxu0 %v763
    %933 = vmatpush.msra.mxu0 %v762
    %934 = vmatmul.f32.gmra.mxu0 %v664
    %v935 = vpop.f32.mrf.mxu0
    %v936 = vadd.f32 %v916, %v935
    %937 = vdwg.mxu0
    %938 = vmatpush.msra.mxu0 %v793
    %939 = vmatpush.msra.mxu0 %v792
    %940 = vmatpush.msra.mxu0 %v791
    %941 = vmatpush.msra.mxu0 %v790
    %942 = vmatpush.msra.mxu0 %v789
    %943 = vmatpush.msra.mxu0 %v788
    %944 = vmatpush.msra.mxu0 %v787
    %945 = vmatpush.msra.mxu0 %v786
    %946 = vmatpush.msra.mxu0 %v785
    %947 = vmatpush.msra.mxu0 %v784
    %948 = vmatpush.msra.mxu0 %v783
    %949 = vmatpush.msra.mxu0 %v782
    %950 = vmatpush.msra.mxu0 %v781
    %951 = vmatpush.msra.mxu0 %v780
    %952 = vmatpush.msra.mxu0 %v779
    %953 = vmatpush.msra.mxu0 %v778
    %954 = vmatmul.f32.gmra.mxu0 %v665
    %v955 = vpop.f32.mrf.mxu0
    %v956 = vadd.f32 %v936, %v955
    %957 = vdwg.mxu0
    %v958 = vmax.f32 %v956, 0.0
    %v959 = vld [vmem:[#allocation18] sm:$0xff]
    %v960 = vld [vmem:[#allocation18 + $0x8] sm:$0xff]
    %v961 = vld [vmem:[#allocation18 + $0x10] sm:$0xff]
    %v962 = vld [vmem:[#allocation18 + $0x18] sm:$0xff]
    %v963 = vld [vmem:[#allocation18 + $0x20] sm:$0xff]
    %v964 = vld [vmem:[#allocation18 + $0x28] sm:$0xff]
    %v965 = vld [vmem:[#allocation18 + $0x30] sm:$0xff]
    %v966 = vld [vmem:[#allocation18 + $0x38] sm:$0xff]
    %v967 = vld [vmem:[#allocation18 + $0x40] sm:$0xff]
    %v968 = vld [vmem:[#allocation18 + $0x48] sm:$0xff]
    %v969 = vld [vmem:[#allocation18 + $0x50] sm:$0xff]
    %v970 = vld [vmem:[#allocation18 + $0x58] sm:$0xff]
    %v971 = vld [vmem:[#allocation18 + $0x60] sm:$0xff]
    %v972 = vld [vmem:[#allocation18 + $0x68] sm:$0xff]
    %v973 = vld [vmem:[#allocation18 + $0x70] sm:$0xff]
    %v974 = vld [vmem:[#allocation18 + $0x78] sm:$0xff]
    %v975 = vld [vmem:[%s14] sm:$0x1]
    %v977 = vperm.slane %v975, 0
    %979 = vmatpush.msra.mxu0 %v974
    %980 = vmatpush.msra.mxu0 %v973
    %981 = vmatpush.msra.mxu0 %v972
    %982 = vmatpush.msra.mxu0 %v971
    %983 = vmatpush.msra.mxu0 %v970
    %984 = vmatpush.msra.mxu0 %v969
    %985 = vmatpush.msra.mxu0 %v968
    %986 = vmatpush.msra.mxu0 %v967
    %987 = vmatpush.msra.mxu0 %v966
    %988 = vmatpush.msra.mxu0 %v965
    %989 = vmatpush.msra.mxu0 %v964
    %990 = vmatpush.msra.mxu0 %v963
    %991 = vmatpush.msra.mxu0 %v962
    %992 = vmatpush.msra.mxu0 %v961
    %993 = vmatpush.msra.mxu0 %v960
    %994 = vmatpush.msra.mxu0 %v959
    %995 = vmatmul.f32.gmra.mxu0 %v958
    %v996 = vpop.f32.mrf.mxu0
    %v997 = vadd.f32 %v977, %v996
    %998 = vdwg.mxu0
    %999 = vst [vmem:[%s15] sm:$0xff] %v997
    // Predicated region
    $region106: #{_critic_forward_impl.1} parent=1 // pred_check
      _
    $region107: #{_critic_forward_impl.1} parent=1 // pred_check_branch
      %1001 = sbr.rel (0) target = $region109
    $region108: #{_critic_forward_impl.1} parent=1 // pred_region
      _
    $region109: #{_critic_forward_impl.1} parent=1 // pred_fallthru
      _
    // Predicated region
    $region110: #{_critic_forward_impl.1} parent=1 // pred_check
      _
    $region111: #{_critic_forward_impl.1} parent=1 // pred_check_branch
      %1003 = sbr.rel (0) target = $region113
    $region112: #{_critic_forward_impl.1} parent=1 // pred_region
      _
    $region113: #{_critic_forward_impl.1} parent=1 // pred_fallthru
      _
    %1004 = vsyncpa [#allocation3], 1
    %1005 = vsyncpa [#allocation5], 1
    %1006 = vsyncpa [#allocation8], 1
    %1007 = vsyncpa [#allocation11], 1
    %1008 = vsyncpa [#allocation14], 1
    %1009 = vsyncpa [#allocation17], 1

</llo_original>
